<compile_context>
chip_gen: v5e
topology: v5e:2x2
jax: 0.10.0
libtpu: 0.0.40
codegen_flags: <defaults>
</compile_context>

<pallas_src>
import functools

import jax
import jax.numpy as jnp
from jax import lax
from jax.experimental import pallas as pl
from jax.experimental.pallas import tpu as pltpu


def _round_up(x, m):
    return -(-x // m) * m


def _yolov2_loss_kernel(pred_ref, targ_ref, colrow_ref, anch_ref, out_ref,
                        *, num_classes, hw, tile_ba, ba_true):
    """One grid step: reduce a (tile_ba, (5+C)*HW) slab to 4 partial sums.

    pred_ref / targ_ref : (tile_ba, (5+C)*HW) native-layout slab (any float)
    colrow_ref          : (2, HW) f32 grid-cell x / y offsets per lane
    anch_ref            : (tile_ba, 2) f32 anchor (w, h) per (b, a) row
    out_ref             : (1, 1, 4) f32 partials [coord, size, obj, class]
    """
    ragged = (ba_true % tile_ba) != 0
    if ragged:
        rows = (lax.broadcasted_iota(jnp.int32, (tile_ba, 1), 0)
                + pl.program_id(0) * tile_ba)
        mask = rows < ba_true                      # (T, 1) bool
        maskf = mask.astype(jnp.float32)

    def ld(ref, c):
        # Lazily slice channel c from the lane axis; keep padded rows finite
        # (masked to 0) so exp/log below can never produce Inf/NaN there.
        x = ref[:, c * hw:(c + 1) * hw].astype(jnp.float32)   # (T, HW)
        if ragged:
            x = jnp.where(mask, x, 0.0)
        return x

    col = colrow_ref[0:1, :]                       # (1, HW)
    row = colrow_ref[1:2, :]
    aw = anch_ref[:, 0:1].astype(jnp.float32)      # (T, 1)
    ah = anch_ref[:, 1:2].astype(jnp.float32)
    if ragged:
        aw = jnp.where(mask, aw, 1.0)              # finite anchors in pad rows
        ah = jnp.where(mask, ah, 1.0)

    # ---- box / objectness channels ----
    tx, ty, tw, th, obj = (ld(pred_ref, c) for c in range(5))
    t0, t1, t2, t3, t4 = (ld(targ_ref, c) for c in range(5))

    sx = 1.0 / (1.0 + jnp.exp(-tx))
    sy = 1.0 / (1.0 + jnp.exp(-ty))
    so = 1.0 / (1.0 + jnp.exp(-obj))

    bx = sx + col
    by = sy + row
    bw = jnp.exp(tw) * aw
    bh = jnp.exp(th) * ah

    coord_sq = (bx - t0) ** 2 + (by - t1) ** 2
    size_sq = (bw - t2) ** 2 + (bh - t3) ** 2

    # Objectness BCE: literal PyTorch BCELoss (log terms clamped at -100).
    # Clamp happens before any masking, preserving reference semantics.
    log_o = jnp.maximum(jnp.log(so), -100.0)
    log_1mo = jnp.maximum(jnp.log(1.0 - so), -100.0)
    bce = -(t4 * log_o + (1.0 - t4) * log_1mo)

    # ---- class loss: softmax over classes, then CrossEntropy (log-softmax
    #      applied AGAIN on the softmax scores, mirroring the reference).
    #      Streamed over classes so only a handful of (T, HW) arrays are live.
    C = num_classes

    # pass 1: running max of class logits + first-occurrence argmax of target
    pmax = ld(pred_ref, 5)
    tmax = ld(targ_ref, 5)
    tidx = jnp.zeros_like(tmax)
    for c in range(1, C):
        pc = ld(pred_ref, 5 + c)
        tc = ld(targ_ref, 5 + c)
        pmax = jnp.maximum(pmax, pc)
        upd = tc > tmax                  # strict ">" keeps first occurrence
        tmax = jnp.where(upd, tc, tmax)
        tidx = jnp.where(upd, jnp.float32(c), tidx)

    # pass 2: softmax denominator (one reciprocal instead of C divides)
    z = jnp.exp(ld(pred_ref, 5) - pmax)
    for c in range(1, C):
        z = z + jnp.exp(ld(pred_ref, 5 + c) - pmax)
    inv_z = 1.0 / z

    # pass 3: LSE over softmax scores + score at target class.  Scores are in
    # [0, 1] (softmax output) so exp(s) cannot overflow -> no max-subtraction.
    esum = jnp.zeros_like(z)
    ssel = jnp.zeros_like(z)
    for c in range(C):
        s_c = jnp.exp(ld(pred_ref, 5 + c) - pmax) * inv_z
        esum = esum + jnp.exp(s_c)
        ssel = ssel + jnp.where(tidx == jnp.float32(c), s_c, 0.0)
    ce = jnp.log(esum) - ssel

    if ragged:
        coord_sq = coord_sq * maskf
        size_sq = size_sq * maskf
        bce = bce * maskf
        ce = ce * maskf

    # ---- single merged output block: 4 partial sums, one writeback ----
    ones = jnp.ones((1, 1, 1), jnp.float32)
    out_ref[:, :, 0:1] = jnp.sum(coord_sq) * ones
    out_ref[:, :, 1:2] = jnp.sum(size_sq) * ones
    out_ref[:, :, 2:3] = jnp.sum(bce) * ones
    out_ref[:, :, 3:4] = jnp.sum(ce) * ones


def _pick_tile_ba(ba, ch, hw, itemsize):
    """Generation-aware tile along B*A plus an explicit scoped-VMEM limit."""
    try:
        info = pltpu.get_tpu_info()
        vmem_cap = int(getattr(info, "vmem_capacity_bytes", 0)) or 64 * 2**20
    except Exception:
        vmem_cap = 64 * 2**20                        # v7x worst case
    # <= ~45 MiB on v7x (64 MiB VMEM), <= 100 MiB on v5e/v6e (128 MiB VMEM).
    budget = min(int(vmem_cap * 0.7), 100 * 2**20)

    lane_pad = _round_up(ch * hw, 128)
    per_ba_inputs = 2 * 2 * lane_pad * itemsize      # 2 tensors x double-buffer
    per_ba_temps = 20 * _round_up(hw, 128) * 4       # ~20 live f32 (T, HW) temps
    tile = int((budget * 0.7) // (per_ba_inputs + per_ba_temps))
    tile = max(8, min(512, (tile // 8) * 8))
    # Keep >= 2 grid steps when possible so both v7x TensorCores get work.
    half = max(8, _round_up(-(-ba // 2), 8))
    return min(tile, half), budget


def yolov2_loss(predictions, targets, grid_size, anchors, num_classes,
                *, tile_ba=None):
    """predictions/targets: (B, A, 5+num_classes, H, W). Returns 4 scalars.

    Inputs may be f32 or bf16 (bf16 halves HBM traffic; kernel upcasts).
    """
    B, A, CH, H, W = predictions.shape
    assert CH == 5 + num_classes
    assert H == grid_size and W == grid_size
    HW = H * W
    BA = B * A
    CHW = CH * HW
    itemsize = jnp.dtype(predictions.dtype).itemsize

    auto_tile, vmem_limit = _pick_tile_ba(BA, CH, HW, itemsize)
    if tile_ba is None:
        tile_ba = auto_tile
    tile_ba = max(8, (int(tile_ba) // 8) * 8)
    num_tiles = -(-BA // tile_ba)

    # Zero-copy views: no transpose, no pad, no extra HBM passes.
    pred2 = predictions.reshape(BA, CHW)
    targ2 = targets.reshape(BA, CHW)

    # Tiny side inputs: grid-cell offsets (2, HW) and per-(b, a) anchors (BA, 2).
    anchors = jnp.asarray(anchors, jnp.float32).reshape(A, 2)
    col = jnp.tile(jnp.arange(W, dtype=jnp.float32), H)        # hw % W
    row = jnp.repeat(jnp.arange(H, dtype=jnp.float32), W)      # hw // W
    colrow = jnp.stack([col, row], axis=0)                     # (2, HW)
    anch = jnp.tile(anchors, (B, 1))                           # (BA, 2)

    kernel = functools.partial(
        _yolov2_loss_kernel, num_classes=num_classes, hw=HW,
        tile_ba=tile_ba, ba_true=BA)

    n_elem = BA * HW
    cost = pl.CostEstimate(
        flops=int((12 * num_classes + 60) * n_elem),
        transcendentals=int((3 * num_classes + 9) * n_elem),
        bytes_accessed=int(2 * CHW * BA * itemsize + 16 * num_tiles),
    )

    slab_spec = pl.BlockSpec((tile_ba, CHW), lambda i: (i, 0))
    partials = pl.pallas_call(
        kernel,
        grid=(num_tiles,),
        in_specs=[
            slab_spec,                                      # predictions slab
            slab_spec,                                      # targets slab
            pl.BlockSpec((2, HW), lambda i: (0, 0)),        # grid offsets
            pl.BlockSpec((tile_ba, 2), lambda i: (i, 0)),   # anchors per row
        ],
        out_specs=pl.BlockSpec((1, 1, 4), lambda i: (i, 0, 0)),
        out_shape=jax.ShapeDtypeStruct((num_tiles, 1, 4), jnp.float32),
        compiler_params=pltpu.CompilerParams(
            dimension_semantics=("parallel",),
            vmem_limit_bytes=int(vmem_limit)),
        cost_estimate=cost,
    )(pred2, targ2, colrow, anch)

    sums = jnp.sum(partials.reshape(num_tiles, 4), axis=0) / jnp.float32(n_elem)
    return sums[0], sums[1], sums[2], sums[3]


def _yolov2_loss_reference(predictions, targets, grid_size, anchors,
                           num_classes):
    """Plain-JAX replica of the PyTorch module, for verification."""
    p = predictions.astype(jnp.float32)
    t = targets.astype(jnp.float32)
    tx, ty, tw, th = p[:, :, 0], p[:, :, 1], p[:, :, 2], p[:, :, 3]
    obj, cls = p[:, :, 4], p[:, :, 5:]
    sx, sy, so = jax.nn.sigmoid(tx), jax.nn.sigmoid(ty), jax.nn.sigmoid(obj)
    s = jax.nn.softmax(cls, axis=2)
    g = jnp.arange(grid_size, dtype=jnp.float32)
    bx = sx + g.reshape(1, 1, 1, -1)
    by = sy + g.reshape(1, 1, -1, 1)
    bw = jnp.exp(tw) * anchors[:, 0].reshape(1, -1, 1, 1)
    bh = jnp.exp(th) * anchors[:, 1].reshape(1, -1, 1, 1)
    coord = jnp.mean((bx - t[:, :, 0]) ** 2) + jnp.mean((by - t[:, :, 1]) ** 2)
    size = jnp.mean((bw - t[:, :, 2]) ** 2) + jnp.mean((bh - t[:, :, 3]) ** 2)
    t4 = t[:, :, 4]
    obj_l = jnp.mean(-(t4 * jnp.maximum(jnp.log(so), -100.0)
                       + (1.0 - t4) * jnp.maximum(jnp.log(1.0 - so), -100.0)))
    y = jnp.argmax(t[:, :, 5:], axis=2).reshape(-1)
    logits = jnp.moveaxis(s, 2, -1).reshape(-1, num_classes)
    logp = jax.nn.log_softmax(logits, axis=-1)
    cls_l = -jnp.mean(jnp.take_along_axis(logp, y[:, None], axis=-1))
    return coord, size, obj_l, cls_l


if __name__ == "__main__":
    key = jax.random.PRNGKey(0)
    B, A, num_classes, grid_size = 3, 5, 6, 13    # small, multi-tile, ragged
    CH = 5 + num_classes

    # deterministic "module parameters": anchors (A, 2)
    anchors = jnp.array([[1.3, 1.7], [2.1, 4.4], [3.2, 2.4],
                         [5.5, 6.2], [9.9, 7.7]], dtype=jnp.float32)

    k1, k2, k3 = jax.random.split(key, 3)
    predictions = jax.random.normal(
        k1, (B, A, CH, grid_size, grid_size), jnp.float32)
    targets = jax.random.normal(
        k2, (B, A, CH, grid_size, grid_size), jnp.float32)
    # objectness target must be a probability in [0, 1] for BCE semantics
    obj_t = jax.random.uniform(k3, (B, A, grid_size, grid_size), jnp.float32)
    targets = targets.at[:, :, 4, :, :].set(obj_t)

    losses = yolov2_loss(predictions, targets, grid_size, anchors, num_classes)
    losses = jax.block_until_ready(losses)

    ref = _yolov2_loss_reference(predictions, targets, grid_size, anchors,
                                 num_classes)
    for got, want in zip(losses, ref):
        assert jnp.allclose(got, want, rtol=2e-3, atol=1e-4), (got, want)

    print("KERNEL_OK")
</pallas_src>

<mosaic_0001>
module attributes {stable_mosaic.version = 11 : i64} {
  func.func @_yolov2_loss_kernel(%arg0: i32, %arg1: memref<8x1859xf32, #tpu.memory_space<vmem>>, %arg2: memref<8x1859xf32, #tpu.memory_space<vmem>>, %arg3: memref<2x169xf32, #tpu.memory_space<vmem>>, %arg4: memref<8x2xf32, #tpu.memory_space<vmem>>, %arg5: memref<1x1x4xf32, #tpu.memory_space<vmem>>) attributes {dimension_semantics = [#tpu.dimension_semantics<parallel>], iteration_bounds = array<i64: 2>, scalar_prefetch = 0 : i64, scratch_operands = 0 : i64, tpu.core_type = #tpu.core_type<tc>, window_params = [{transform_indices = @transform_0, window_bounds = array<i64: 8, 1859>}, {transform_indices = @transform_1, window_bounds = array<i64: 8, 1859>}, {pipeline_mode = #tpu.pipeline_mode<synchronous>, transform_indices = @transform_2, window_bounds = array<i64: 2, 169>}, {transform_indices = @transform_3, window_bounds = array<i64: 8, 2>}, {transform_indices = @transform_4, window_bounds = array<i64: 1, 1, 4>}]} {
    %0 = tpu.iota {dimensions = array<i32: 0>} : vector<8x1xi32>
    %c8_i32 = arith.constant 8 : i32
    %1 = arith.muli %arg0, %c8_i32 : i32
    %2 = vector.broadcast %1 : i32 to vector<8x1xi32>
    %3 = arith.addi %0, %2 : vector<8x1xi32>
    %c15_i32 = arith.constant 15 : i32
    %4 = vector.broadcast %c15_i32 : i32 to vector<8x1xi32>
    %5 = arith.cmpi slt, %3, %4 : vector<8x1xi32>
    %6 = arith.extui %5 : vector<8x1xi1> to vector<8x1xi32>
    %7 = arith.sitofp %6 : vector<8x1xi32> to vector<8x1xf32>
    %c0 = arith.constant 0 : index
    %c0_0 = arith.constant 0 : index
    %8 = vector.load %arg3[%c0, %c0_0] : memref<2x169xf32, #tpu.memory_space<vmem>>, vector<1x169xf32>
    %c1 = arith.constant 1 : index
    %c0_1 = arith.constant 0 : index
    %9 = vector.load %arg3[%c1, %c0_1] : memref<2x169xf32, #tpu.memory_space<vmem>>, vector<1x169xf32>
    %c0_2 = arith.constant 0 : index
    %c0_3 = arith.constant 0 : index
    %10 = vector.load %arg4[%c0_2, %c0_3] : memref<8x2xf32, #tpu.memory_space<vmem>>, vector<8x1xf32>
    %c0_4 = arith.constant 0 : index
    %c1_5 = arith.constant 1 : index
    %11 = vector.load %arg4[%c0_4, %c1_5] : memref<8x2xf32, #tpu.memory_space<vmem>>, vector<8x1xf32>
    %cst = arith.constant 1.000000e+00 : f32
    %12 = vector.broadcast %cst : f32 to vector<8x1xf32>
    %13 = arith.select %5, %10, %12 : vector<8x1xi1>, vector<8x1xf32>
    %cst_6 = arith.constant 1.000000e+00 : f32
    %14 = vector.broadcast %cst_6 : f32 to vector<8x1xf32>
    %15 = arith.select %5, %11, %14 : vector<8x1xi1>, vector<8x1xf32>
    %c0_7 = arith.constant 0 : index
    %c0_8 = arith.constant 0 : index
    %16 = vector.load %arg1[%c0_7, %c0_8] : memref<8x1859xf32, #tpu.memory_space<vmem>>, vector<8x169xf32>
    %cst_9 = arith.constant 0.000000e+00 : f32
    %17 = vector.shape_cast %5 : vector<8x1xi1> to vector<8x1xi1>
    %18 = vector.broadcast %17 : vector<8x1xi1> to vector<8x169xi1>
    %19 = vector.broadcast %cst_9 : f32 to vector<8x169xf32>
    %20 = arith.select %18, %16, %19 : vector<8x169xi1>, vector<8x169xf32>
    %c0_10 = arith.constant 0 : index
    %c169 = arith.constant 169 : index
    %21 = vector.load %arg1[%c0_10, %c169] : memref<8x1859xf32, #tpu.memory_space<vmem>>, vector<8x169xf32>
    %cst_11 = arith.constant 0.000000e+00 : f32
    %22 = vector.shape_cast %5 : vector<8x1xi1> to vector<8x1xi1>
    %23 = vector.broadcast %22 : vector<8x1xi1> to vector<8x169xi1>
    %24 = vector.broadcast %cst_11 : f32 to vector<8x169xf32>
    %25 = arith.select %23, %21, %24 : vector<8x169xi1>, vector<8x169xf32>
    %c0_12 = arith.constant 0 : index
    %c338 = arith.constant 338 : index
    %26 = vector.load %arg1[%c0_12, %c338] : memref<8x1859xf32, #tpu.memory_space<vmem>>, vector<8x169xf32>
    %cst_13 = arith.constant 0.000000e+00 : f32
    %27 = vector.shape_cast %5 : vector<8x1xi1> to vector<8x1xi1>
    %28 = vector.broadcast %27 : vector<8x1xi1> to vector<8x169xi1>
    %29 = vector.broadcast %cst_13 : f32 to vector<8x169xf32>
    %30 = arith.select %28, %26, %29 : vector<8x169xi1>, vector<8x169xf32>
    %c0_14 = arith.constant 0 : index
    %c507 = arith.constant 507 : index
    %31 = vector.load %arg1[%c0_14, %c507] : memref<8x1859xf32, #tpu.memory_space<vmem>>, vector<8x169xf32>
    %cst_15 = arith.constant 0.000000e+00 : f32
    %32 = vector.shape_cast %5 : vector<8x1xi1> to vector<8x1xi1>
    %33 = vector.broadcast %32 : vector<8x1xi1> to vector<8x169xi1>
    %34 = vector.broadcast %cst_15 : f32 to vector<8x169xf32>
    %35 = arith.select %33, %31, %34 : vector<8x169xi1>, vector<8x169xf32>
    %c0_16 = arith.constant 0 : index
    %c676 = arith.constant 676 : index
    %36 = vector.load %arg1[%c0_16, %c676] : memref<8x1859xf32, #tpu.memory_space<vmem>>, vector<8x169xf32>
    %cst_17 = arith.constant 0.000000e+00 : f32
    %37 = vector.shape_cast %5 : vector<8x1xi1> to vector<8x1xi1>
    %38 = vector.broadcast %37 : vector<8x1xi1> to vector<8x169xi1>
    %39 = vector.broadcast %cst_17 : f32 to vector<8x169xf32>
    %40 = arith.select %38, %36, %39 : vector<8x169xi1>, vector<8x169xf32>
    %c0_18 = arith.constant 0 : index
    %c0_19 = arith.constant 0 : index
    %41 = vector.load %arg2[%c0_18, %c0_19] : memref<8x1859xf32, #tpu.memory_space<vmem>>, vector<8x169xf32>
    %cst_20 = arith.constant 0.000000e+00 : f32
    %42 = vector.shape_cast %5 : vector<8x1xi1> to vector<8x1xi1>
    %43 = vector.broadcast %42 : vector<8x1xi1> to vector<8x169xi1>
    %44 = vector.broadcast %cst_20 : f32 to vector<8x169xf32>
    %45 = arith.select %43, %41, %44 : vector<8x169xi1>, vector<8x169xf32>
    %c0_21 = arith.constant 0 : index
    %c169_22 = arith.constant 169 : index
    %46 = vector.load %arg2[%c0_21, %c169_22] : memref<8x1859xf32, #tpu.memory_space<vmem>>, vector<8x169xf32>
    %cst_23 = arith.constant 0.000000e+00 : f32
    %47 = vector.shape_cast %5 : vector<8x1xi1> to vector<8x1xi1>
    %48 = vector.broadcast %47 : vector<8x1xi1> to vector<8x169xi1>
    %49 = vector.broadcast %cst_23 : f32 to vector<8x169xf32>
    %50 = arith.select %48, %46, %49 : vector<8x169xi1>, vector<8x169xf32>
    %c0_24 = arith.constant 0 : index
    %c338_25 = arith.constant 338 : index
    %51 = vector.load %arg2[%c0_24, %c338_25] : memref<8x1859xf32, #tpu.memory_space<vmem>>, vector<8x169xf32>
    %cst_26 = arith.constant 0.000000e+00 : f32
    %52 = vector.shape_cast %5 : vector<8x1xi1> to vector<8x1xi1>
    %53 = vector.broadcast %52 : vector<8x1xi1> to vector<8x169xi1>
    %54 = vector.broadcast %cst_26 : f32 to vector<8x169xf32>
    %55 = arith.select %53, %51, %54 : vector<8x169xi1>, vector<8x169xf32>
    %c0_27 = arith.constant 0 : index
    %c507_28 = arith.constant 507 : index
    %56 = vector.load %arg2[%c0_27, %c507_28] : memref<8x1859xf32, #tpu.memory_space<vmem>>, vector<8x169xf32>
    %cst_29 = arith.constant 0.000000e+00 : f32
    %57 = vector.shape_cast %5 : vector<8x1xi1> to vector<8x1xi1>
    %58 = vector.broadcast %57 : vector<8x1xi1> to vector<8x169xi1>
    %59 = vector.broadcast %cst_29 : f32 to vector<8x169xf32>
    %60 = arith.select %58, %56, %59 : vector<8x169xi1>, vector<8x169xf32>
    %c0_30 = arith.constant 0 : index
    %c676_31 = arith.constant 676 : index
    %61 = vector.load %arg2[%c0_30, %c676_31] : memref<8x1859xf32, #tpu.memory_space<vmem>>, vector<8x169xf32>
    %cst_32 = arith.constant 0.000000e+00 : f32
    %62 = vector.shape_cast %5 : vector<8x1xi1> to vector<8x1xi1>
    %63 = vector.broadcast %62 : vector<8x1xi1> to vector<8x169xi1>
    %64 = vector.broadcast %cst_32 : f32 to vector<8x169xf32>
    %65 = arith.select %63, %61, %64 : vector<8x169xi1>, vector<8x169xf32>
    %cst_33 = arith.constant 0.000000e+00 : f32
    %66 = vector.broadcast %cst_33 : f32 to vector<8x169xf32>
    %67 = arith.subf %66, %20 : vector<8x169xf32>
    %68 = math.exp %67 : vector<8x169xf32>
    %cst_34 = arith.constant 1.000000e+00 : f32
    %69 = vector.broadcast %cst_34 : f32 to vector<8x169xf32>
    %70 = arith.addf %69, %68 : vector<8x169xf32>
    %cst_35 = arith.constant 1.000000e+00 : f32
    %71 = vector.broadcast %cst_35 : f32 to vector<8x169xf32>
    %72 = arith.divf %71, %70 : vector<8x169xf32>
    %cst_36 = arith.constant 0.000000e+00 : f32
    %73 = vector.broadcast %cst_36 : f32 to vector<8x169xf32>
    %74 = arith.subf %73, %25 : vector<8x169xf32>
    %75 = math.exp %74 : vector<8x169xf32>
    %cst_37 = arith.constant 1.000000e+00 : f32
    %76 = vector.broadcast %cst_37 : f32 to vector<8x169xf32>
    %77 = arith.addf %76, %75 : vector<8x169xf32>
    %cst_38 = arith.constant 1.000000e+00 : f32
    %78 = vector.broadcast %cst_38 : f32 to vector<8x169xf32>
    %79 = arith.divf %78, %77 : vector<8x169xf32>
    %cst_39 = arith.constant 0.000000e+00 : f32
    %80 = vector.broadcast %cst_39 : f32 to vector<8x169xf32>
    %81 = arith.subf %80, %40 : vector<8x169xf32>
    %82 = math.exp %81 : vector<8x169xf32>
    %cst_40 = arith.constant 1.000000e+00 : f32
    %83 = vector.broadcast %cst_40 : f32 to vector<8x169xf32>
    %84 = arith.addf %83, %82 : vector<8x169xf32>
    %cst_41 = arith.constant 1.000000e+00 : f32
    %85 = vector.broadcast %cst_41 : f32 to vector<8x169xf32>
    %86 = arith.divf %85, %84 : vector<8x169xf32>
    %87 = vector.broadcast %8 : vector<1x169xf32> to vector<8x169xf32>
    %88 = arith.addf %72, %87 : vector<8x169xf32>
    %89 = vector.broadcast %9 : vector<1x169xf32> to vector<8x169xf32>
    %90 = arith.addf %79, %89 : vector<8x169xf32>
    %91 = math.exp %30 : vector<8x169xf32>
    %92 = vector.broadcast %13 : vector<8x1xf32> to vector<8x169xf32>
    %93 = arith.mulf %91, %92 : vector<8x169xf32>
    %94 = math.exp %35 : vector<8x169xf32>
    %95 = vector.broadcast %15 : vector<8x1xf32> to vector<8x169xf32>
    %96 = arith.mulf %94, %95 : vector<8x169xf32>
    %97 = arith.subf %88, %45 : vector<8x169xf32>
    %98 = arith.mulf %97, %97 : vector<8x169xf32>
    %99 = arith.subf %90, %50 : vector<8x169xf32>
    %100 = arith.mulf %99, %99 : vector<8x169xf32>
    %101 = arith.addf %98, %100 : vector<8x169xf32>
    %102 = arith.subf %93, %55 : vector<8x169xf32>
    %103 = arith.mulf %102, %102 : vector<8x169xf32>
    %104 = arith.subf %96, %60 : vector<8x169xf32>
    %105 = arith.mulf %104, %104 : vector<8x169xf32>
    %106 = arith.addf %103, %105 : vector<8x169xf32>
    %107 = math.log %86 : vector<8x169xf32>
    %cst_42 = arith.constant -1.000000e+02 : f32
    %108 = vector.broadcast %cst_42 : f32 to vector<8x169xf32>
    %109 = arith.maximumf %107, %108 : vector<8x169xf32>
    %cst_43 = arith.constant 1.000000e+00 : f32
    %110 = vector.broadcast %cst_43 : f32 to vector<8x169xf32>
    %111 = arith.subf %110, %86 : vector<8x169xf32>
    %112 = math.log %111 : vector<8x169xf32>
    %cst_44 = arith.constant -1.000000e+02 : f32
    %113 = vector.broadcast %cst_44 : f32 to vector<8x169xf32>
    %114 = arith.maximumf %112, %113 : vector<8x169xf32>
    %115 = arith.mulf %65, %109 : vector<8x169xf32>
    %cst_45 = arith.constant 1.000000e+00 : f32
    %116 = vector.broadcast %cst_45 : f32 to vector<8x169xf32>
    %117 = arith.subf %116, %65 : vector<8x169xf32>
    %118 = arith.mulf %117, %114 : vector<8x169xf32>
    %119 = arith.addf %115, %118 : vector<8x169xf32>
    %cst_46 = arith.constant 0.000000e+00 : f32
    %120 = vector.broadcast %cst_46 : f32 to vector<8x169xf32>
    %121 = arith.subf %120, %119 : vector<8x169xf32>
    %c0_47 = arith.constant 0 : index
    %c845 = arith.constant 845 : index
    %122 = vector.load %arg1[%c0_47, %c845] : memref<8x1859xf32, #tpu.memory_space<vmem>>, vector<8x169xf32>
    %cst_48 = arith.constant 0.000000e+00 : f32
    %123 = vector.shape_cast %5 : vector<8x1xi1> to vector<8x1xi1>
    %124 = vector.broadcast %123 : vector<8x1xi1> to vector<8x169xi1>
    %125 = vector.broadcast %cst_48 : f32 to vector<8x169xf32>
    %126 = arith.select %124, %122, %125 : vector<8x169xi1>, vector<8x169xf32>
    %c0_49 = arith.constant 0 : index
    %c845_50 = arith.constant 845 : index
    %127 = vector.load %arg2[%c0_49, %c845_50] : memref<8x1859xf32, #tpu.memory_space<vmem>>, vector<8x169xf32>
    %cst_51 = arith.constant 0.000000e+00 : f32
    %128 = vector.shape_cast %5 : vector<8x1xi1> to vector<8x1xi1>
    %129 = vector.broadcast %128 : vector<8x1xi1> to vector<8x169xi1>
    %130 = vector.broadcast %cst_51 : f32 to vector<8x169xf32>
    %131 = arith.select %129, %127, %130 : vector<8x169xi1>, vector<8x169xf32>
    %cst_52 = arith.constant 0.000000e+00 : f32
    %132 = vector.broadcast %cst_52 : f32 to vector<8x169xf32>
    %c0_53 = arith.constant 0 : index
    %c1014 = arith.constant 1014 : index
    %133 = vector.load %arg1[%c0_53, %c1014] : memref<8x1859xf32, #tpu.memory_space<vmem>>, vector<8x169xf32>
    %cst_54 = arith.constant 0.000000e+00 : f32
    %134 = vector.shape_cast %5 : vector<8x1xi1> to vector<8x1xi1>
    %135 = vector.broadcast %134 : vector<8x1xi1> to vector<8x169xi1>
    %136 = vector.broadcast %cst_54 : f32 to vector<8x169xf32>
    %137 = arith.select %135, %133, %136 : vector<8x169xi1>, vector<8x169xf32>
    %c0_55 = arith.constant 0 : index
    %c1014_56 = arith.constant 1014 : index
    %138 = vector.load %arg2[%c0_55, %c1014_56] : memref<8x1859xf32, #tpu.memory_space<vmem>>, vector<8x169xf32>
    %cst_57 = arith.constant 0.000000e+00 : f32
    %139 = vector.shape_cast %5 : vector<8x1xi1> to vector<8x1xi1>
    %140 = vector.broadcast %139 : vector<8x1xi1> to vector<8x169xi1>
    %141 = vector.broadcast %cst_57 : f32 to vector<8x169xf32>
    %142 = arith.select %140, %138, %141 : vector<8x169xi1>, vector<8x169xf32>
    %143 = arith.maximumf %126, %137 : vector<8x169xf32>
    %144 = arith.cmpf ogt, %142, %131 : vector<8x169xf32>
    %145 = arith.select %144, %142, %131 : vector<8x169xi1>, vector<8x169xf32>
    %cst_58 = arith.constant 1.000000e+00 : f32
    %146 = vector.broadcast %cst_58 : f32 to vector<8x169xf32>
    %147 = arith.select %144, %146, %132 : vector<8x169xi1>, vector<8x169xf32>
    %c0_59 = arith.constant 0 : index
    %c1183 = arith.constant 1183 : index
    %148 = vector.load %arg1[%c0_59, %c1183] : memref<8x1859xf32, #tpu.memory_space<vmem>>, vector<8x169xf32>
    %cst_60 = arith.constant 0.000000e+00 : f32
    %149 = vector.shape_cast %5 : vector<8x1xi1> to vector<8x1xi1>
    %150 = vector.broadcast %149 : vector<8x1xi1> to vector<8x169xi1>
    %151 = vector.broadcast %cst_60 : f32 to vector<8x169xf32>
    %152 = arith.select %150, %148, %151 : vector<8x169xi1>, vector<8x169xf32>
    %c0_61 = arith.constant 0 : index
    %c1183_62 = arith.constant 1183 : index
    %153 = vector.load %arg2[%c0_61, %c1183_62] : memref<8x1859xf32, #tpu.memory_space<vmem>>, vector<8x169xf32>
    %cst_63 = arith.constant 0.000000e+00 : f32
    %154 = vector.shape_cast %5 : vector<8x1xi1> to vector<8x1xi1>
    %155 = vector.broadcast %154 : vector<8x1xi1> to vector<8x169xi1>
    %156 = vector.broadcast %cst_63 : f32 to vector<8x169xf32>
    %157 = arith.select %155, %153, %156 : vector<8x169xi1>, vector<8x169xf32>
    %158 = arith.maximumf %143, %152 : vector<8x169xf32>
    %159 = arith.cmpf ogt, %157, %145 : vector<8x169xf32>
    %160 = arith.select %159, %157, %145 : vector<8x169xi1>, vector<8x169xf32>
    %cst_64 = arith.constant 2.000000e+00 : f32
    %161 = vector.broadcast %cst_64 : f32 to vector<8x169xf32>
    %162 = arith.select %159, %161, %147 : vector<8x169xi1>, vector<8x169xf32>
    %c0_65 = arith.constant 0 : index
    %c1352 = arith.constant 1352 : index
    %163 = vector.load %arg1[%c0_65, %c1352] : memref<8x1859xf32, #tpu.memory_space<vmem>>, vector<8x169xf32>
    %cst_66 = arith.constant 0.000000e+00 : f32
    %164 = vector.shape_cast %5 : vector<8x1xi1> to vector<8x1xi1>
    %165 = vector.broadcast %164 : vector<8x1xi1> to vector<8x169xi1>
    %166 = vector.broadcast %cst_66 : f32 to vector<8x169xf32>
    %167 = arith.select %165, %163, %166 : vector<8x169xi1>, vector<8x169xf32>
    %c0_67 = arith.constant 0 : index
    %c1352_68 = arith.constant 1352 : index
    %168 = vector.load %arg2[%c0_67, %c1352_68] : memref<8x1859xf32, #tpu.memory_space<vmem>>, vector<8x169xf32>
    %cst_69 = arith.constant 0.000000e+00 : f32
    %169 = vector.shape_cast %5 : vector<8x1xi1> to vector<8x1xi1>
    %170 = vector.broadcast %169 : vector<8x1xi1> to vector<8x169xi1>
    %171 = vector.broadcast %cst_69 : f32 to vector<8x169xf32>
    %172 = arith.select %170, %168, %171 : vector<8x169xi1>, vector<8x169xf32>
    %173 = arith.maximumf %158, %167 : vector<8x169xf32>
    %174 = arith.cmpf ogt, %172, %160 : vector<8x169xf32>
    %175 = arith.select %174, %172, %160 : vector<8x169xi1>, vector<8x169xf32>
    %cst_70 = arith.constant 3.000000e+00 : f32
    %176 = vector.broadcast %cst_70 : f32 to vector<8x169xf32>
    %177 = arith.select %174, %176, %162 : vector<8x169xi1>, vector<8x169xf32>
    %c0_71 = arith.constant 0 : index
    %c1521 = arith.constant 1521 : index
    %178 = vector.load %arg1[%c0_71, %c1521] : memref<8x1859xf32, #tpu.memory_space<vmem>>, vector<8x169xf32>
    %cst_72 = arith.constant 0.000000e+00 : f32
    %179 = vector.shape_cast %5 : vector<8x1xi1> to vector<8x1xi1>
    %180 = vector.broadcast %179 : vector<8x1xi1> to vector<8x169xi1>
    %181 = vector.broadcast %cst_72 : f32 to vector<8x169xf32>
    %182 = arith.select %180, %178, %181 : vector<8x169xi1>, vector<8x169xf32>
    %c0_73 = arith.constant 0 : index
    %c1521_74 = arith.constant 1521 : index
    %183 = vector.load %arg2[%c0_73, %c1521_74] : memref<8x1859xf32, #tpu.memory_space<vmem>>, vector<8x169xf32>
    %cst_75 = arith.constant 0.000000e+00 : f32
    %184 = vector.shape_cast %5 : vector<8x1xi1> to vector<8x1xi1>
    %185 = vector.broadcast %184 : vector<8x1xi1> to vector<8x169xi1>
    %186 = vector.broadcast %cst_75 : f32 to vector<8x169xf32>
    %187 = arith.select %185, %183, %186 : vector<8x169xi1>, vector<8x169xf32>
    %188 = arith.maximumf %173, %182 : vector<8x169xf32>
    %189 = arith.cmpf ogt, %187, %175 : vector<8x169xf32>
    %190 = arith.select %189, %187, %175 : vector<8x169xi1>, vector<8x169xf32>
    %cst_76 = arith.constant 4.000000e+00 : f32
    %191 = vector.broadcast %cst_76 : f32 to vector<8x169xf32>
    %192 = arith.select %189, %191, %177 : vector<8x169xi1>, vector<8x169xf32>
    %c0_77 = arith.constant 0 : index
    %c1690 = arith.constant 1690 : index
    %193 = vector.load %arg1[%c0_77, %c1690] : memref<8x1859xf32, #tpu.memory_space<vmem>>, vector<8x169xf32>
    %cst_78 = arith.constant 0.000000e+00 : f32
    %194 = vector.shape_cast %5 : vector<8x1xi1> to vector<8x1xi1>
    %195 = vector.broadcast %194 : vector<8x1xi1> to vector<8x169xi1>
    %196 = vector.broadcast %cst_78 : f32 to vector<8x169xf32>
    %197 = arith.select %195, %193, %196 : vector<8x169xi1>, vector<8x169xf32>
    %c0_79 = arith.constant 0 : index
    %c1690_80 = arith.constant 1690 : index
    %198 = vector.load %arg2[%c0_79, %c1690_80] : memref<8x1859xf32, #tpu.memory_space<vmem>>, vector<8x169xf32>
    %cst_81 = arith.constant 0.000000e+00 : f32
    %199 = vector.shape_cast %5 : vector<8x1xi1> to vector<8x1xi1>
    %200 = vector.broadcast %199 : vector<8x1xi1> to vector<8x169xi1>
    %201 = vector.broadcast %cst_81 : f32 to vector<8x169xf32>
    %202 = arith.select %200, %198, %201 : vector<8x169xi1>, vector<8x169xf32>
    %203 = arith.maximumf %188, %197 : vector<8x169xf32>
    %204 = arith.cmpf ogt, %202, %190 : vector<8x169xf32>
    %cst_82 = arith.constant 5.000000e+00 : f32
    %205 = vector.broadcast %cst_82 : f32 to vector<8x169xf32>
    %206 = arith.select %204, %205, %192 : vector<8x169xi1>, vector<8x169xf32>
    %c0_83 = arith.constant 0 : index
    %c845_84 = arith.constant 845 : index
    %207 = vector.load %arg1[%c0_83, %c845_84] : memref<8x1859xf32, #tpu.memory_space<vmem>>, vector<8x169xf32>
    %cst_85 = arith.constant 0.000000e+00 : f32
    %208 = vector.shape_cast %5 : vector<8x1xi1> to vector<8x1xi1>
    %209 = vector.broadcast %208 : vector<8x1xi1> to vector<8x169xi1>
    %210 = vector.broadcast %cst_85 : f32 to vector<8x169xf32>
    %211 = arith.select %209, %207, %210 : vector<8x169xi1>, vector<8x169xf32>
    %212 = arith.subf %211, %203 : vector<8x169xf32>
    %213 = math.exp %212 : vector<8x169xf32>
    %c0_86 = arith.constant 0 : index
    %c1014_87 = arith.constant 1014 : index
    %214 = vector.load %arg1[%c0_86, %c1014_87] : memref<8x1859xf32, #tpu.memory_space<vmem>>, vector<8x169xf32>
    %cst_88 = arith.constant 0.000000e+00 : f32
    %215 = vector.shape_cast %5 : vector<8x1xi1> to vector<8x1xi1>
    %216 = vector.broadcast %215 : vector<8x1xi1> to vector<8x169xi1>
    %217 = vector.broadcast %cst_88 : f32 to vector<8x169xf32>
    %218 = arith.select %216, %214, %217 : vector<8x169xi1>, vector<8x169xf32>
    %219 = arith.subf %218, %203 : vector<8x169xf32>
    %220 = math.exp %219 : vector<8x169xf32>
    %221 = arith.addf %213, %220 : vector<8x169xf32>
    %c0_89 = arith.constant 0 : index
    %c1183_90 = arith.constant 1183 : index
    %222 = vector.load %arg1[%c0_89, %c1183_90] : memref<8x1859xf32, #tpu.memory_space<vmem>>, vector<8x169xf32>
    %cst_91 = arith.constant 0.000000e+00 : f32
    %223 = vector.shape_cast %5 : vector<8x1xi1> to vector<8x1xi1>
    %224 = vector.broadcast %223 : vector<8x1xi1> to vector<8x169xi1>
    %225 = vector.broadcast %cst_91 : f32 to vector<8x169xf32>
    %226 = arith.select %224, %222, %225 : vector<8x169xi1>, vector<8x169xf32>
    %227 = arith.subf %226, %203 : vector<8x169xf32>
    %228 = math.exp %227 : vector<8x169xf32>
    %229 = arith.addf %221, %228 : vector<8x169xf32>
    %c0_92 = arith.constant 0 : index
    %c1352_93 = arith.constant 1352 : index
    %230 = vector.load %arg1[%c0_92, %c1352_93] : memref<8x1859xf32, #tpu.memory_space<vmem>>, vector<8x169xf32>
    %cst_94 = arith.constant 0.000000e+00 : f32
    %231 = vector.shape_cast %5 : vector<8x1xi1> to vector<8x1xi1>
    %232 = vector.broadcast %231 : vector<8x1xi1> to vector<8x169xi1>
    %233 = vector.broadcast %cst_94 : f32 to vector<8x169xf32>
    %234 = arith.select %232, %230, %233 : vector<8x169xi1>, vector<8x169xf32>
    %235 = arith.subf %234, %203 : vector<8x169xf32>
    %236 = math.exp %235 : vector<8x169xf32>
    %237 = arith.addf %229, %236 : vector<8x169xf32>
    %c0_95 = arith.constant 0 : index
    %c1521_96 = arith.constant 1521 : index
    %238 = vector.load %arg1[%c0_95, %c1521_96] : memref<8x1859xf32, #tpu.memory_space<vmem>>, vector<8x169xf32>
    %cst_97 = arith.constant 0.000000e+00 : f32
    %239 = vector.shape_cast %5 : vector<8x1xi1> to vector<8x1xi1>
    %240 = vector.broadcast %239 : vector<8x1xi1> to vector<8x169xi1>
    %241 = vector.broadcast %cst_97 : f32 to vector<8x169xf32>
    %242 = arith.select %240, %238, %241 : vector<8x169xi1>, vector<8x169xf32>
    %243 = arith.subf %242, %203 : vector<8x169xf32>
    %244 = math.exp %243 : vector<8x169xf32>
    %245 = arith.addf %237, %244 : vector<8x169xf32>
    %c0_98 = arith.constant 0 : index
    %c1690_99 = arith.constant 1690 : index
    %246 = vector.load %arg1[%c0_98, %c1690_99] : memref<8x1859xf32, #tpu.memory_space<vmem>>, vector<8x169xf32>
    %cst_100 = arith.constant 0.000000e+00 : f32
    %247 = vector.shape_cast %5 : vector<8x1xi1> to vector<8x1xi1>
    %248 = vector.broadcast %247 : vector<8x1xi1> to vector<8x169xi1>
    %249 = vector.broadcast %cst_100 : f32 to vector<8x169xf32>
    %250 = arith.select %248, %246, %249 : vector<8x169xi1>, vector<8x169xf32>
    %251 = arith.subf %250, %203 : vector<8x169xf32>
    %252 = math.exp %251 : vector<8x169xf32>
    %253 = arith.addf %245, %252 : vector<8x169xf32>
    %cst_101 = arith.constant 1.000000e+00 : f32
    %254 = vector.broadcast %cst_101 : f32 to vector<8x169xf32>
    %255 = arith.divf %254, %253 : vector<8x169xf32>
    %cst_102 = arith.constant 0.000000e+00 : f32
    %256 = vector.broadcast %cst_102 : f32 to vector<8x169xf32>
    %cst_103 = arith.constant 0.000000e+00 : f32
    %257 = vector.broadcast %cst_103 : f32 to vector<8x169xf32>
    %c0_104 = arith.constant 0 : index
    %c845_105 = arith.constant 845 : index
    %258 = vector.load %arg1[%c0_104, %c845_105] : memref<8x1859xf32, #tpu.memory_space<vmem>>, vector<8x169xf32>
    %cst_106 = arith.constant 0.000000e+00 : f32
    %259 = vector.shape_cast %5 : vector<8x1xi1> to vector<8x1xi1>
    %260 = vector.broadcast %259 : vector<8x1xi1> to vector<8x169xi1>
    %261 = vector.broadcast %cst_106 : f32 to vector<8x169xf32>
    %262 = arith.select %260, %258, %261 : vector<8x169xi1>, vector<8x169xf32>
    %263 = arith.subf %262, %203 : vector<8x169xf32>
    %264 = math.exp %263 : vector<8x169xf32>
    %265 = arith.mulf %264, %255 : vector<8x169xf32>
    %266 = math.exp %265 : vector<8x169xf32>
    %267 = arith.addf %256, %266 : vector<8x169xf32>
    %cst_107 = arith.constant 0.000000e+00 : f32
    %268 = vector.broadcast %cst_107 : f32 to vector<8x169xf32>
    %269 = arith.cmpf oeq, %206, %268 : vector<8x169xf32>
    %cst_108 = arith.constant 0.000000e+00 : f32
    %270 = vector.broadcast %cst_108 : f32 to vector<8x169xf32>
    %271 = arith.select %269, %265, %270 : vector<8x169xi1>, vector<8x169xf32>
    %272 = arith.addf %257, %271 : vector<8x169xf32>
    %c0_109 = arith.constant 0 : index
    %c1014_110 = arith.constant 1014 : index
    %273 = vector.load %arg1[%c0_109, %c1014_110] : memref<8x1859xf32, #tpu.memory_space<vmem>>, vector<8x169xf32>
    %cst_111 = arith.constant 0.000000e+00 : f32
    %274 = vector.shape_cast %5 : vector<8x1xi1> to vector<8x1xi1>
    %275 = vector.broadcast %274 : vector<8x1xi1> to vector<8x169xi1>
    %276 = vector.broadcast %cst_111 : f32 to vector<8x169xf32>
    %277 = arith.select %275, %273, %276 : vector<8x169xi1>, vector<8x169xf32>
    %278 = arith.subf %277, %203 : vector<8x169xf32>
    %279 = math.exp %278 : vector<8x169xf32>
    %280 = arith.mulf %279, %255 : vector<8x169xf32>
    %281 = math.exp %280 : vector<8x169xf32>
    %282 = arith.addf %267, %281 : vector<8x169xf32>
    %cst_112 = arith.constant 1.000000e+00 : f32
    %283 = vector.broadcast %cst_112 : f32 to vector<8x169xf32>
    %284 = arith.cmpf oeq, %206, %283 : vector<8x169xf32>
    %cst_113 = arith.constant 0.000000e+00 : f32
    %285 = vector.broadcast %cst_113 : f32 to vector<8x169xf32>
    %286 = arith.select %284, %280, %285 : vector<8x169xi1>, vector<8x169xf32>
    %287 = arith.addf %272, %286 : vector<8x169xf32>
    %c0_114 = arith.constant 0 : index
    %c1183_115 = arith.constant 1183 : index
    %288 = vector.load %arg1[%c0_114, %c1183_115] : memref<8x1859xf32, #tpu.memory_space<vmem>>, vector<8x169xf32>
    %cst_116 = arith.constant 0.000000e+00 : f32
    %289 = vector.shape_cast %5 : vector<8x1xi1> to vector<8x1xi1>
    %290 = vector.broadcast %289 : vector<8x1xi1> to vector<8x169xi1>
    %291 = vector.broadcast %cst_116 : f32 to vector<8x169xf32>
    %292 = arith.select %290, %288, %291 : vector<8x169xi1>, vector<8x169xf32>
    %293 = arith.subf %292, %203 : vector<8x169xf32>
    %294 = math.exp %293 : vector<8x169xf32>
    %295 = arith.mulf %294, %255 : vector<8x169xf32>
    %296 = math.exp %295 : vector<8x169xf32>
    %297 = arith.addf %282, %296 : vector<8x169xf32>
    %cst_117 = arith.constant 2.000000e+00 : f32
    %298 = vector.broadcast %cst_117 : f32 to vector<8x169xf32>
    %299 = arith.cmpf oeq, %206, %298 : vector<8x169xf32>
    %cst_118 = arith.constant 0.000000e+00 : f32
    %300 = vector.broadcast %cst_118 : f32 to vector<8x169xf32>
    %301 = arith.select %299, %295, %300 : vector<8x169xi1>, vector<8x169xf32>
    %302 = arith.addf %287, %301 : vector<8x169xf32>
    %c0_119 = arith.constant 0 : index
    %c1352_120 = arith.constant 1352 : index
    %303 = vector.load %arg1[%c0_119, %c1352_120] : memref<8x1859xf32, #tpu.memory_space<vmem>>, vector<8x169xf32>
    %cst_121 = arith.constant 0.000000e+00 : f32
    %304 = vector.shape_cast %5 : vector<8x1xi1> to vector<8x1xi1>
    %305 = vector.broadcast %304 : vector<8x1xi1> to vector<8x169xi1>
    %306 = vector.broadcast %cst_121 : f32 to vector<8x169xf32>
    %307 = arith.select %305, %303, %306 : vector<8x169xi1>, vector<8x169xf32>
    %308 = arith.subf %307, %203 : vector<8x169xf32>
    %309 = math.exp %308 : vector<8x169xf32>
    %310 = arith.mulf %309, %255 : vector<8x169xf32>
    %311 = math.exp %310 : vector<8x169xf32>
    %312 = arith.addf %297, %311 : vector<8x169xf32>
    %cst_122 = arith.constant 3.000000e+00 : f32
    %313 = vector.broadcast %cst_122 : f32 to vector<8x169xf32>
    %314 = arith.cmpf oeq, %206, %313 : vector<8x169xf32>
    %cst_123 = arith.constant 0.000000e+00 : f32
    %315 = vector.broadcast %cst_123 : f32 to vector<8x169xf32>
    %316 = arith.select %314, %310, %315 : vector<8x169xi1>, vector<8x169xf32>
    %317 = arith.addf %302, %316 : vector<8x169xf32>
    %c0_124 = arith.constant 0 : index
    %c1521_125 = arith.constant 1521 : index
    %318 = vector.load %arg1[%c0_124, %c1521_125] : memref<8x1859xf32, #tpu.memory_space<vmem>>, vector<8x169xf32>
    %cst_126 = arith.constant 0.000000e+00 : f32
    %319 = vector.shape_cast %5 : vector<8x1xi1> to vector<8x1xi1>
    %320 = vector.broadcast %319 : vector<8x1xi1> to vector<8x169xi1>
    %321 = vector.broadcast %cst_126 : f32 to vector<8x169xf32>
    %322 = arith.select %320, %318, %321 : vector<8x169xi1>, vector<8x169xf32>
    %323 = arith.subf %322, %203 : vector<8x169xf32>
    %324 = math.exp %323 : vector<8x169xf32>
    %325 = arith.mulf %324, %255 : vector<8x169xf32>
    %326 = math.exp %325 : vector<8x169xf32>
    %327 = arith.addf %312, %326 : vector<8x169xf32>
    %cst_127 = arith.constant 4.000000e+00 : f32
    %328 = vector.broadcast %cst_127 : f32 to vector<8x169xf32>
    %329 = arith.cmpf oeq, %206, %328 : vector<8x169xf32>
    %cst_128 = arith.constant 0.000000e+00 : f32
    %330 = vector.broadcast %cst_128 : f32 to vector<8x169xf32>
    %331 = arith.select %329, %325, %330 : vector<8x169xi1>, vector<8x169xf32>
    %332 = arith.addf %317, %331 : vector<8x169xf32>
    %c0_129 = arith.constant 0 : index
    %c1690_130 = arith.constant 1690 : index
    %333 = vector.load %arg1[%c0_129, %c1690_130] : memref<8x1859xf32, #tpu.memory_space<vmem>>, vector<8x169xf32>
    %cst_131 = arith.constant 0.000000e+00 : f32
    %334 = vector.shape_cast %5 : vector<8x1xi1> to vector<8x1xi1>
    %335 = vector.broadcast %334 : vector<8x1xi1> to vector<8x169xi1>
    %336 = vector.broadcast %cst_131 : f32 to vector<8x169xf32>
    %337 = arith.select %335, %333, %336 : vector<8x169xi1>, vector<8x169xf32>
    %338 = arith.subf %337, %203 : vector<8x169xf32>
    %339 = math.exp %338 : vector<8x169xf32>
    %340 = arith.mulf %339, %255 : vector<8x169xf32>
    %341 = math.exp %340 : vector<8x169xf32>
    %342 = arith.addf %327, %341 : vector<8x169xf32>
    %cst_132 = arith.constant 5.000000e+00 : f32
    %343 = vector.broadcast %cst_132 : f32 to vector<8x169xf32>
    %344 = arith.cmpf oeq, %206, %343 : vector<8x169xf32>
    %cst_133 = arith.constant 0.000000e+00 : f32
    %345 = vector.broadcast %cst_133 : f32 to vector<8x169xf32>
    %346 = arith.select %344, %340, %345 : vector<8x169xi1>, vector<8x169xf32>
    %347 = arith.addf %332, %346 : vector<8x169xf32>
    %348 = math.log %342 : vector<8x169xf32>
    %349 = arith.subf %348, %347 : vector<8x169xf32>
    %350 = vector.broadcast %7 : vector<8x1xf32> to vector<8x169xf32>
    %351 = arith.mulf %101, %350 : vector<8x169xf32>
    %352 = vector.broadcast %7 : vector<8x1xf32> to vector<8x169xf32>
    %353 = arith.mulf %106, %352 : vector<8x169xf32>
    %354 = vector.broadcast %7 : vector<8x1xf32> to vector<8x169xf32>
    %355 = arith.mulf %121, %354 : vector<8x169xf32>
    %356 = vector.broadcast %7 : vector<8x1xf32> to vector<8x169xf32>
    %357 = arith.mulf %349, %356 : vector<8x169xf32>
    %cst_134 = arith.constant 1.000000e+00 : f32
    %358 = vector.broadcast %cst_134 : f32 to vector<1x1x1xf32>
    %359 = vector.shape_cast %351 : vector<8x169xf32> to vector<1x8x169xf32>
    %cst_135 = arith.constant dense<0.000000e+00> : vector<1xf32>
    %360 = vector.multi_reduction <add>, %359, %cst_135 [1, 2] : vector<1x8x169xf32> to vector<1xf32>
    %361 = vector.shape_cast %360 : vector<1xf32> to vector<1x1x1xf32>
    %362 = vector.extract %361[0, 0, 0] : f32 from vector<1x1x1xf32>
    %363 = vector.broadcast %362 : f32 to vector<1x1x1xf32>
    %364 = arith.mulf %363, %358 : vector<1x1x1xf32>
    %c0_136 = arith.constant 0 : index
    %c0_137 = arith.constant 0 : index
    %c0_138 = arith.constant 0 : index
    %365 = vector.load %arg5[%c0_136, %c0_137, %c0_138] : memref<1x1x4xf32, #tpu.memory_space<vmem>>, vector<1x1x1xf32>
    tpu.vector_store %arg5[%c0_136, %c0_137, %c0_138], %364 {strides = array<i32>} : memref<1x1x4xf32, #tpu.memory_space<vmem>>, vector<1x1x1xf32>,
    %366 = vector.shape_cast %353 : vector<8x169xf32> to vector<1x8x169xf32>
    %cst_139 = arith.constant dense<0.000000e+00> : vector<1xf32>
    %367 = vector.multi_reduction <add>, %366, %cst_139 [1, 2] : vector<1x8x169xf32> to vector<1xf32>
    %368 = vector.shape_cast %367 : vector<1xf32> to vector<1x1x1xf32>
    %369 = vector.extract %368[0, 0, 0] : f32 from vector<1x1x1xf32>
    %370 = vector.broadcast %369 : f32 to vector<1x1x1xf32>
    %371 = arith.mulf %370, %358 : vector<1x1x1xf32>
    %c0_140 = arith.constant 0 : index
    %c0_141 = arith.constant 0 : index
    %c1_142 = arith.constant 1 : index
    %372 = vector.load %arg5[%c0_140, %c0_141, %c1_142] : memref<1x1x4xf32, #tpu.memory_space<vmem>>, vector<1x1x1xf32>
    tpu.vector_store %arg5[%c0_140, %c0_141, %c1_142], %371 {strides = array<i32>} : memref<1x1x4xf32, #tpu.memory_space<vmem>>, vector<1x1x1xf32>,
    %373 = vector.shape_cast %355 : vector<8x169xf32> to vector<1x8x169xf32>
    %cst_143 = arith.constant dense<0.000000e+00> : vector<1xf32>
    %374 = vector.multi_reduction <add>, %373, %cst_143 [1, 2] : vector<1x8x169xf32> to vector<1xf32>
    %375 = vector.shape_cast %374 : vector<1xf32> to vector<1x1x1xf32>
    %376 = vector.extract %375[0, 0, 0] : f32 from vector<1x1x1xf32>
    %377 = vector.broadcast %376 : f32 to vector<1x1x1xf32>
    %378 = arith.mulf %377, %358 : vector<1x1x1xf32>
    %c0_144 = arith.constant 0 : index
    %c0_145 = arith.constant 0 : index
    %c2 = arith.constant 2 : index
    %379 = vector.load %arg5[%c0_144, %c0_145, %c2] : memref<1x1x4xf32, #tpu.memory_space<vmem>>, vector<1x1x1xf32>
    tpu.vector_store %arg5[%c0_144, %c0_145, %c2], %378 {strides = array<i32>} : memref<1x1x4xf32, #tpu.memory_space<vmem>>, vector<1x1x1xf32>,
    %380 = vector.shape_cast %357 : vector<8x169xf32> to vector<1x8x169xf32>
    %cst_146 = arith.constant dense<0.000000e+00> : vector<1xf32>
    %381 = vector.multi_reduction <add>, %380, %cst_146 [1, 2] : vector<1x8x169xf32> to vector<1xf32>
    %382 = vector.shape_cast %381 : vector<1xf32> to vector<1x1x1xf32>
    %383 = vector.extract %382[0, 0, 0] : f32 from vector<1x1x1xf32>
    %384 = vector.broadcast %383 : f32 to vector<1x1x1xf32>
    %385 = arith.mulf %384, %358 : vector<1x1x1xf32>
    %c0_147 = arith.constant 0 : index
    %c0_148 = arith.constant 0 : index
    %c3 = arith.constant 3 : index
    %386 = vector.load %arg5[%c0_147, %c0_148, %c3] : memref<1x1x4xf32, #tpu.memory_space<vmem>>, vector<1x1x1xf32>
    tpu.vector_store %arg5[%c0_147, %c0_148, %c3], %385 {strides = array<i32>} : memref<1x1x4xf32, #tpu.memory_space<vmem>>, vector<1x1x1xf32>,
    return
  }
  func.func @transform_0(%arg0: i32) -> (i32, i32) {
    %c0_i32 = arith.constant 0 : i32
    %c0_i32_0 = arith.constant 0 : i32
    return %arg0, %c0_i32 : i32, i32
  }
  func.func @transform_1(%arg0: i32) -> (i32, i32) {
    %c0_i32 = arith.constant 0 : i32
    %c0_i32_0 = arith.constant 0 : i32
    return %arg0, %c0_i32 : i32, i32
  }
  func.func @transform_2(%arg0: i32) -> (i32, i32) {
    %c0_i32 = arith.constant 0 : i32
    %c0_i32_0 = arith.constant 0 : i32
    %c0_i32_1 = arith.constant 0 : i32
    return %c0_i32, %c0_i32_0 : i32, i32
  }
  func.func @transform_3(%arg0: i32) -> (i32, i32) {
    %c0_i32 = arith.constant 0 : i32
    %c0_i32_0 = arith.constant 0 : i32
    return %arg0, %c0_i32 : i32, i32
  }
  func.func @transform_4(%arg0: i32) -> (i32, i32, i32) {
    %c0_i32 = arith.constant 0 : i32
    %c0_i32_0 = arith.constant 0 : i32
    %c0_i32_1 = arith.constant 0 : i32
    return %arg0, %c0_i32, %c0_i32_0 : i32, i32, i32
  }
}

</mosaic_0001>

<llo_original>
// kernel: tpu_custom_call.1
$region0: #{tpu_custom_call.1}
  #allocation0 [shape = 'u32[]', space=smem, size = 0x4, offset = 0x4, fixed_abs, tag = 'smem constant byte address 0x4 - core index']
  #allocation1 [shape = 'u32[72,128]{1,0:T(1,128)}', space=vmem, size = 0x9000, scoped, tag = 'internal scratch']
  %s0 = inlined_call_operand.hbm [shape: f32[15,1859], index: 0, kind: input, shape index: {}]
  %s1 = inlined_call_operand.hbm [shape: f32[15,1859], index: 1, kind: input, shape index: {}]
  %s2 = inlined_call_operand.vmem [shape: f32[2,169], index: 2, kind: input, shape index: {}]
  %s3 = inlined_call_operand.vmem [shape: f32[15,2], index: 3, kind: input, shape index: {}]
  %s4 = inlined_call_operand.hbm [shape: f32[2,1,4], index: 4, kind: output, shape index: {}]
  %s5 = sld [smem:[#allocation0]]
  $region57: #{tpu_custom_call.1} parent=0
    _
  %s7 = ssub.s32 1, %s5
  %s8 = scalar_select 0, %s7, %s5
  $region1: #{tpu_custom_call.1} parent=0
    #allocation2 [shape = 'u8[122880]{0}', space=vmem, size = 0x1e000, scoped, tag = 'input window, operand 0']
    #allocation3 [shape = 's32[2]{0}', space=sflag, size = 0x8, scoped, tag = 'scoped memory for tpu_custom_call.1']
    #allocation4 [shape = 's32[2]{0}', space=sflag, size = 0x8, scoped, tag = 'scoped memory for tpu_custom_call.1']
    #allocation5 [shape = 'u8[122880]{0}', space=vmem, size = 0x1e000, scoped, tag = 'input window, operand 1']
    #allocation6 [shape = 's32[2]{0}', space=sflag, size = 0x8, scoped, tag = 'scoped memory for tpu_custom_call.1']
    #allocation7 [shape = 'u8[1024]{0}', space=vmem, size = 0x400, scoped, tag = 'output window, operand 0']
    %9 = vsyncpa [#allocation3], 0
    %s10 = scalar_lea.sflag [#allocation3], 1
    %11 = vsyncpa %s10, 0
    %12 = vsyncpa [#allocation6], 0
    %s13 = scalar_lea.sflag [#allocation6], 1
    %14 = vsyncpa %s13, 0
    %15 = vsyncpa [#allocation4], 0
    %s16 = scalar_lea.sflag [#allocation4], 1
    %17 = vsyncpa %s16, 0
    loop: start=0, step=1, limit=4
    $region2: #{tpu_custom_call.1} parent=1 // loop_pre_header
      _
    $region3: #{tpu_custom_call.1} parent=1 // loop_header
      %s19 = sphi 0, %s23
      %p20 = scmp.ge.s32.totalorder %s19, 4
      %s29 = sphi 0, %s31
      %s32 = sphi 0, %s29
      %s33 = sphi 0, %s32
      %s49 = sphi 0, %s33
      %s55 = sphi 0, %s57
      %s58 = sphi 0, %s55
      %s59 = sphi 0, %s58
      %s75 = sphi 0, %s59
      %s79 = sphi 0, %s79
      %s81 = sphi 0, %s79
      %s82 = sphi 0, %s81
      %s96 = sphi 0, %s82
      %s102 = sphi 0, %s104
      %s105 = sphi 0, %s102
      %s106 = sphi 0, %s105
      %s122 = sphi 0, %s106
      %s128 = sphi 0, %s130
      %s131 = sphi 0, %s128
      %s132 = sphi 0, %s131
      %s148 = sphi 0, %s132
    $region4: #{tpu_custom_call.1} parent=1 // loop_header_branch
      %22 = sbr.rel (%p20) target = $region8
    $region5: #{tpu_custom_call.1} parent=1 // loop_body
      %s24 = ssub.s32 %s19, 1
      %s25 = ssub.s32 %s19, 2
      %s26 = sadd.s32 %s19, 1
      %s27 = ssub.s32 %s19, %s26
      %p28 = scmp.eq.s32.totalorder %s27, 0
      %s30 = sadd.s32 %s29, 1
      %s31 = scalar_select %p28, %s29, %s30
      %p34 = pneg %p28
      %p35 = scmp.eq.s32.totalorder %s19, 1
      %p36 = por %p34, %p35
      %p37 = scmp.ne.s32.totalorder %s29, %s32
      %p38 = scmp.eq.s32.totalorder %s19, 0
      %p39 = por %p37, %p38
      %p40 = scmp.ne.s32.totalorder %s29, %s32
      %p41 = scmp.eq.s32.totalorder %s24, 1
      %p42 = por %p40, %p41
      %p43 = scmp.ne.s32.totalorder %s32, %s33
      %p44 = scmp.eq.s32.totalorder %s24, 0
      %p45 = por %p43, %p44
      %p46 = scmp.ne.s32.totalorder %s32, %s33
      %p47 = scmp.eq.s32.totalorder %s25, 1
      %p48 = por %p46, %p47
      %p50 = scmp.ne.s32.totalorder %s33, %s49
      %p51 = scmp.eq.s32.totalorder %s25, 0
      %p52 = por %p50, %p51
      %s53 = ssub.s32 %s19, %s26
      %p54 = scmp.eq.s32.totalorder %s53, 0
      %s56 = sadd.s32 %s55, 1
      %s57 = scalar_select %p54, %s55, %s56
      %p60 = pneg %p54
      %p61 = scmp.eq.s32.totalorder %s19, 1
      %p62 = por %p60, %p61
      %p63 = scmp.ne.s32.totalorder %s55, %s58
      %p64 = scmp.eq.s32.totalorder %s19, 0
      %p65 = por %p63, %p64
      %p66 = scmp.ne.s32.totalorder %s55, %s58
      %p67 = scmp.eq.s32.totalorder %s24, 1
      %p68 = por %p66, %p67
      %p69 = scmp.ne.s32.totalorder %s58, %s59
      %p70 = scmp.eq.s32.totalorder %s24, 0
      %p71 = por %p69, %p70
      %p72 = scmp.ne.s32.totalorder %s58, %s59
      %p73 = scmp.eq.s32.totalorder %s25, 1
      %p74 = por %p72, %p73
      %p76 = scmp.ne.s32.totalorder %s59, %s75
      %p77 = scmp.eq.s32.totalorder %s25, 0
      %p78 = por %p76, %p77
      %s80 = sadd.s32 %s79, 1
      %p83 = scmp.eq.s32.totalorder %s19, 1
      %p84 = scmp.ne.s32.totalorder %s79, %s81
      %p85 = scmp.eq.s32.totalorder %s19, 0
      %p86 = por %p84, %p85
      %p87 = scmp.ne.s32.totalorder %s79, %s81
      %p88 = scmp.eq.s32.totalorder %s24, 1
      %p89 = por %p87, %p88
      %p90 = scmp.ne.s32.totalorder %s81, %s82
      %p91 = scmp.eq.s32.totalorder %s24, 0
      %p92 = por %p90, %p91
      %p93 = scmp.ne.s32.totalorder %s81, %s82
      %p94 = scmp.eq.s32.totalorder %s25, 1
      %p95 = por %p93, %p94
      %p97 = scmp.ne.s32.totalorder %s82, %s96
      %p98 = scmp.eq.s32.totalorder %s25, 0
      %p99 = por %p97, %p98
      %s100 = ssub.s32 %s19, %s26
      %p101 = scmp.eq.s32.totalorder %s100, 0
      %s103 = sadd.s32 %s102, 1
      %s104 = scalar_select %p101, %s102, %s103
      %p107 = pneg %p101
      %p108 = scmp.eq.s32.totalorder %s19, 1
      %p109 = por %p107, %p108
      %p110 = scmp.ne.s32.totalorder %s102, %s105
      %p111 = scmp.eq.s32.totalorder %s19, 0
      %p112 = por %p110, %p111
      %p113 = scmp.ne.s32.totalorder %s102, %s105
      %p114 = scmp.eq.s32.totalorder %s24, 1
      %p115 = por %p113, %p114
      %p116 = scmp.ne.s32.totalorder %s105, %s106
      %p117 = scmp.eq.s32.totalorder %s24, 0
      %p118 = por %p116, %p117
      %p119 = scmp.ne.s32.totalorder %s105, %s106
      %p120 = scmp.eq.s32.totalorder %s25, 1
      %p121 = por %p119, %p120
      %p123 = scmp.ne.s32.totalorder %s106, %s122
      %p124 = scmp.eq.s32.totalorder %s25, 0
      %p125 = por %p123, %p124
      %s126 = ssub.s32 %s19, %s26
      %p127 = scmp.eq.s32.totalorder %s126, 0
      %s129 = sadd.s32 %s128, 1
      %s130 = scalar_select %p127, %s128, %s129
      %p133 = pneg %p127
      %p134 = scmp.eq.s32.totalorder %s19, 1
      %p135 = por %p133, %p134
      %p136 = scmp.ne.s32.totalorder %s128, %s131
      %p137 = scmp.eq.s32.totalorder %s19, 0
      %p138 = por %p136, %p137
      %p139 = scmp.ne.s32.totalorder %s128, %s131
      %p140 = scmp.eq.s32.totalorder %s24, 1
      %p141 = por %p139, %p140
      %p142 = scmp.ne.s32.totalorder %s131, %s132
      %p143 = scmp.eq.s32.totalorder %s24, 0
      %p144 = por %p142, %p143
      %p145 = scmp.ne.s32.totalorder %s131, %s132
      %p146 = scmp.eq.s32.totalorder %s25, 1
      %p147 = por %p145, %p146
      %p149 = scmp.ne.s32.totalorder %s132, %s148
      %p150 = scmp.eq.s32.totalorder %s25, 0
      %p151 = por %p149, %p150
      %p152 = scmp.le.s32.totalorder 1, %s19
      %p153 = scmp.lt.s32.totalorder %s19, 3
      %p154 = pnand %p152, %p153
      %p155 = pneg %p154
      // Predicated region
      $region9: #{tpu_custom_call.1} parent=5 // pred_check
        _
      $region10: #{tpu_custom_call.1} parent=5 // pred_check_branch
        %157 = sbr.rel (%p154) target = $region12
      $region11: #{tpu_custom_call.1} parent=5 // pred_region
        %s158 = ssub.s32 %s19, 1
        // Predicated region
        $region13: #{tpu_custom_call.1} parent=11 // pred_check
          %p159 = pneg %p92
        $region14: #{tpu_custom_call.1} parent=11 // pred_check_branch
          %161 = sbr.rel (%p159) target = $region16
        $region15: #{tpu_custom_call.1} parent=11 // pred_region
          _
        $region16: #{tpu_custom_call.1} parent=11 // pred_fallthru
          _
      $region12: #{tpu_custom_call.1} parent=5 // pred_fallthru
        _
      %p162 = scmp.lt.s32.totalorder %s19, 2
      // Predicated region
      $region17: #{tpu_custom_call.1} parent=5 // pred_check
        %p163 = pneg %p162
      $region18: #{tpu_custom_call.1} parent=5 // pred_check_branch
        %165 = sbr.rel (%p163) target = $region20
      $region19: #{tpu_custom_call.1} parent=5 // pred_region
        // Predicated region
        $region21: #{tpu_custom_call.1} parent=19 // pred_check
          %p166 = pneg %p39
        $region22: #{tpu_custom_call.1} parent=19 // pred_check_branch
          %168 = sbr.rel (%p166) target = $region24
        $region23: #{tpu_custom_call.1} parent=19 // pred_region
          %s169 = sand.u32 %s29, 1
          %s170 = scalar_lea.sflag [#allocation3], %s169
          %s171 = sand.u32 %s29, 1
          %s172 = smul.addr %s171, 120
          %s173 = scalar_lea.vmem [#allocation2], %s172
          %175 = vsyncadd %s170, 0
          %s176 = smul.addr %s19, 15
          %s177 = smul.addr %s176, 8
          %s178 = scalar_lea.hbm %s0, %s177
          %s180 = sshll.u32 %s178, 4
          %s181 = int_to_ptr.hbm [resolvable:$true] %s180
          %s182 = sshll.u32 %s173, 4
          %s183 = int_to_ptr.vmem [resolvable:$true] %s182
          %185 = dma.hbm_to_vmem [thread:$0]  %s181, 1920, %s183, %s170
        $region24: #{tpu_custom_call.1} parent=19 // pred_fallthru
          _
        // Predicated region
        $region25: #{tpu_custom_call.1} parent=19 // pred_check
          %p186 = pneg %p65
        $region26: #{tpu_custom_call.1} parent=19 // pred_check_branch
          %188 = sbr.rel (%p186) target = $region28
        $region27: #{tpu_custom_call.1} parent=19 // pred_region
          %s189 = sand.u32 %s55, 1
          %s190 = scalar_lea.sflag [#allocation6], %s189
          %s191 = sand.u32 %s55, 1
          %s192 = smul.addr %s191, 120
          %s193 = scalar_lea.vmem [#allocation5], %s192
          %195 = vsyncadd %s190, 0
          %s196 = smul.addr %s19, 15
          %s197 = smul.addr %s196, 8
          %s198 = scalar_lea.hbm %s1, %s197
          %s200 = sshll.u32 %s198, 4
          %s201 = int_to_ptr.hbm [resolvable:$true] %s200
          %s202 = sshll.u32 %s193, 4
          %s203 = int_to_ptr.vmem [resolvable:$true] %s202
          %205 = dma.hbm_to_vmem [thread:$0]  %s201, 1920, %s203, %s190
        $region28: #{tpu_custom_call.1} parent=19 // pred_fallthru
          _
        // Predicated region
        $region29: #{tpu_custom_call.1} parent=19 // pred_check
          %p206 = pneg %p112
        $region30: #{tpu_custom_call.1} parent=19 // pred_check_branch
          %208 = sbr.rel (%p206) target = $region32
        $region31: #{tpu_custom_call.1} parent=19 // pred_region
          %p209 = scmp.lt.s32.totalorder %s19, 1
          %s210 = scalar_select %p209, %s19, 1
          %s211 = smul.addr %s210, 8
          %s212 = scalar_lea.vmem %s3, %s211
        $region32: #{tpu_custom_call.1} parent=19 // pred_fallthru
          _
      $region20: #{tpu_custom_call.1} parent=5 // pred_fallthru
        _
      %p213 = scmp.le.s32.totalorder 1, %s19
      %p214 = scmp.lt.s32.totalorder %s19, 3
      %p215 = pnand %p213, %p214
      %p216 = pneg %p215
      // Predicated region
      $region33: #{tpu_custom_call.1} parent=5 // pred_check
        _
      $region34: #{tpu_custom_call.1} parent=5 // pred_check_branch
        %218 = sbr.rel (%p215) target = $region36
      $region35: #{tpu_custom_call.1} parent=5 // pred_region
        %s219 = ssub.s32 %s19, 1
        %s220 = sand.u32 %s32, 1
        %s221 = scalar_lea.sflag [#allocation3], %s220
        %s222 = sand.u32 %s32, 1
        %s223 = smul.addr %s222, 120
        %s224 = scalar_lea.vmem [#allocation2], %s223
        // Predicated region
        $region37: #{tpu_custom_call.1} parent=35 // pred_check
          %p225 = pneg %p45
        $region38: #{tpu_custom_call.1} parent=35 // pred_check_branch
          %227 = sbr.rel (%p225) target = $region40
        $region39: #{tpu_custom_call.1} parent=35 // pred_region
          %229 = dma.done %s221, 1920
        $region40: #{tpu_custom_call.1} parent=35 // pred_fallthru
          _
        %s230 = sand.u32 %s58, 1
        %s231 = scalar_lea.sflag [#allocation6], %s230
        %s232 = sand.u32 %s58, 1
        %s233 = smul.addr %s232, 120
        %s234 = scalar_lea.vmem [#allocation5], %s233
        // Predicated region
        $region41: #{tpu_custom_call.1} parent=35 // pred_check
          %p235 = pneg %p71
        $region42: #{tpu_custom_call.1} parent=35 // pred_check_branch
          %237 = sbr.rel (%p235) target = $region44
        $region43: #{tpu_custom_call.1} parent=35 // pred_region
          %239 = dma.done %s231, 1920
        $region44: #{tpu_custom_call.1} parent=35 // pred_fallthru
          _
        %s240 = sand.u32 %s32, 1
        %s241 = scalar_lea.sflag [#allocation3], %s240
        %s242 = sand.u32 %s32, 1
        %s243 = smul.addr %s242, 120
        %s244 = scalar_lea.vmem [#allocation2], %s243
        %p245 = pneg %p45
        %p246 = pneg %p42
        %s247 = sand.u32 %s58, 1
        %s248 = scalar_lea.sflag [#allocation6], %s247
        %s249 = sand.u32 %s58, 1
        %s250 = smul.addr %s249, 120
        %s251 = scalar_lea.vmem [#allocation5], %s250
        %p252 = pneg %p71
        %p253 = pneg %p68
        %p254 = pneg %p92
        %p255 = pneg %p89
        %p256 = scmp.lt.s32.totalorder %s24, 1
        %s257 = scalar_select %p256, %s24, 1
        %s258 = smul.addr %s257, 8
        %s259 = scalar_lea.vmem %s3, %s258
        %p260 = pneg %p118
        %p261 = pneg %p115
        %p262 = pneg %p144
        %p263 = pneg %p141
        %s264 = sand.u32 %s131, 1
        %s265 = scalar_lea.sflag [#allocation4], %s264
        %s266 = sand.u32 %s131, 1
        %s267 = scalar_lea.vmem [#allocation7], %s266
        %p268 = scmp.lt.s32.totalorder %s24, 1
        %s269 = scalar_select %p268, %s24, 1
        %s270 = smul.addr %s269, 8
        %s271 = scalar_lea.vmem %s3, %s270
        %v272 = vlaneseq
        %v273 = vshrl.u32 %v272, 7
        %s274 = smul.u32 %s24, 8
        %v275 = vstv %s274
        %v276 = vadd.s32 %v273, %v275
        %vm277 = vcmp.lt.s32.totalorder %v276, 15
        %v278 = vsel %vm277, 1, 0
        %v279 = vcvt.s32.f32 %v278
        %v280 = vld [vmem:[%s2] ss:$2 sm:$0x3]
        %s281 = scalar_lea.vmem %s2, 1
        %v282 = vld [vmem:[%s281] ss:$2 sm:$0x3]
        %v283 = vld [vmem:[%s271] sm:$0xff]
        %v284 = vsel %vm277, %v283, 1.0
        %v285 = vld [vmem:[%s224] sm:$0xff]
        %v286 = vld [vmem:[%s224 + $0x8] sm:$0xff]
        %vm287 = vcmp.eq.s32.totalorder %v278, 1
        %v288 = vsel %vm287, %v285, 0.0
        %v289 = vsel %vm287, %v286, 0.0
        %v290 = vld [vmem:[%s224 + $0x10] sm:$0xff]
        %v291 = vsel %vm287, %v290, 0.0
        %v292 = vld [vmem:[%s224 + $0x18] sm:$0xff]
        %v293 = vsel %vm287, %v292, 0.0
        %v294 = vld [vmem:[%s224 + $0x20] sm:$0xff]
        %v295 = vld [vmem:[%s224 + $0x28] sm:$0xff]
        %v296 = vsel %vm287, %v294, 0.0
        %v297 = vsel %vm287, %v295, 0.0
        %v298 = vld [vmem:[%s224 + $0x30] sm:$0xff]
        %v299 = vsel %vm287, %v298, 0.0
        %v300 = vld [vmem:[%s234] sm:$0xff]
        %v301 = vld [vmem:[%s234 + $0x8] sm:$0xff]
        %v302 = vsel %vm287, %v300, 0.0
        %v303 = vsel %vm287, %v301, 0.0
        %v304 = vld [vmem:[%s234 + $0x10] sm:$0xff]
        %v305 = vsel %vm287, %v304, 0.0
        %v306 = vld [vmem:[%s234 + $0x18] sm:$0xff]
        %v307 = vsel %vm287, %v306, 0.0
        %v308 = vld [vmem:[%s234 + $0x20] sm:$0xff]
        %v309 = vld [vmem:[%s234 + $0x28] sm:$0xff]
        %v310 = vsel %vm287, %v308, 0.0
        %v311 = vsel %vm287, %v309, 0.0
        %v312 = vld [vmem:[%s234 + $0x30] sm:$0xff]
        %v313 = vsel %vm287, %v312, 0.0
        %v314 = vsub.f32 0.0, %v288
        %v315 = vsub.f32 0.0, %v289
        %v316 = vmul.f32 %v314, 1.442695
        %v317 = vpow.pop %v316
        %v318 = vmul.f32 %v315, 1.442695
        %v319 = vpow.pop %v318
        %v320 = vadd.f32 %v317, 1.0
        %v321 = vadd.f32 %v319, 1.0
        %v322 = vrcp.pop %v320
        %v323 = vmul.f32 %v320, %v322
        %v324 = vsub.f32 1.0, %v323
        %v325 = vmul.f32 %v322, %v324
        %v326 = vadd.f32 %v322, %v325
        %vm327 = vweird.f32 %v320
        %vm328 = vweird.f32 %v322
        %vm329 = vmor %vm327, %vm328
        %v330 = vsel %vm329, %v322, %v326
        %v331 = vand.u32 2147483647, %v320
        %vm332 = vcmp.eq.f32.partialorder %v331, 8.507059e+37
        %v333 = vand.u32 %v320, 2147483648
        %v334 = vor.u32 1.1754944e-38, %v333
        %v335 = vsel %vm332, %v334, %v330
        %v336 = vmul.f32 1.0, %v335
        %v337 = vrcp.pop %v321
        %v338 = vmul.f32 %v321, %v337
        %v339 = vsub.f32 1.0, %v338
        %v340 = vmul.f32 %v337, %v339
        %v341 = vadd.f32 %v337, %v340
        %vm342 = vweird.f32 %v321
        %vm343 = vweird.f32 %v337
        %vm344 = vmor %vm342, %vm343
        %v345 = vsel %vm344, %v337, %v341
        %v346 = vand.u32 2147483647, %v321
        %vm347 = vcmp.eq.f32.partialorder %v346, 8.507059e+37
        %v348 = vand.u32 %v321, 2147483648
        %v349 = vor.u32 1.1754944e-38, %v348
        %v350 = vsel %vm347, %v349, %v345
        %v351 = vmul.f32 1.0, %v350
        %v352 = vsub.f32 0.0, %v291
        %v353 = vmul.f32 %v352, 1.442695
        %v354 = vpow.pop %v353
        %v355 = vadd.f32 %v354, 1.0
        %v356 = vrcp.pop %v355
        %v357 = vmul.f32 %v355, %v356
        %v358 = vsub.f32 1.0, %v357
        %v359 = vmul.f32 %v356, %v358
        %v360 = vadd.f32 %v356, %v359
        %vm361 = vweird.f32 %v355
        %vm362 = vweird.f32 %v356
        %vm363 = vmor %vm361, %vm362
        %v364 = vsel %vm363, %v356, %v360
        %v365 = vand.u32 2147483647, %v355
        %vm366 = vcmp.eq.f32.partialorder %v365, 8.507059e+37
        %v367 = vand.u32 %v355, 2147483648
        %v368 = vor.u32 1.1754944e-38, %v367
        %v369 = vsel %vm366, %v368, %v364
        %v370 = vmul.f32 1.0, %v369
        %v371 = vsub.f32 0.0, %v297
        %v372 = vsub.f32 0.0, %v299
        %v373 = vmul.f32 %v371, 1.442695
        %v374 = vpow.pop %v373
        %v375 = vmul.f32 %v372, 1.442695
        %v376 = vpow.pop %v375
        %v377 = vadd.f32 %v374, 1.0
        %v378 = vadd.f32 %v376, 1.0
        %v379 = vrcp.pop %v377
        %v380 = vmul.f32 %v377, %v379
        %v381 = vsub.f32 1.0, %v380
        %v382 = vmul.f32 %v379, %v381
        %v383 = vadd.f32 %v379, %v382
        %vm384 = vweird.f32 %v377
        %vm385 = vweird.f32 %v379
        %vm386 = vmor %vm384, %vm385
        %v387 = vsel %vm386, %v379, %v383
        %v388 = vand.u32 2147483647, %v377
        %vm389 = vcmp.eq.f32.partialorder %v388, 8.507059e+37
        %v390 = vand.u32 %v377, 2147483648
        %v391 = vor.u32 1.1754944e-38, %v390
        %v392 = vsel %vm389, %v391, %v387
        %v393 = vmul.f32 1.0, %v392
        %v394 = vrcp.pop %v378
        %v395 = vmul.f32 %v378, %v394
        %v396 = vsub.f32 1.0, %v395
        %v397 = vmul.f32 %v394, %v396
        %v398 = vadd.f32 %v394, %v397
        %vm399 = vweird.f32 %v378
        %vm400 = vweird.f32 %v394
        %vm401 = vmor %vm399, %vm400
        %v402 = vsel %vm401, %v394, %v398
        %v403 = vand.u32 2147483647, %v378
        %vm404 = vcmp.eq.f32.partialorder %v403, 8.507059e+37
        %v405 = vand.u32 %v378, 2147483648
        %v406 = vor.u32 1.1754944e-38, %v405
        %v407 = vsel %vm404, %v406, %v402
        %v408 = vmul.f32 1.0, %v407
        %v410 = vperm.slane %v280, 0
        %v411 = vperm.slane %v280, 1
        %v414 = vadd.f32 %v336, %v410
        %v415 = vadd.f32 %v351, %v411
        %v417 = vperm.slane %v282, 0
        %v418 = vperm.slane %v282, 1
        %419 = vrot.lane.b32.xlu0 %v417, 41
        %v420 = vpop.permute.xlu0 %419
        %421 = vrot.lane.b32.xlu0 %v418, 41
        %v422 = vpop.permute.xlu0 %421
        %vm423 = vcmask 334848
        %v424 = vsel %vm423, %v420, %v422
        %v427 = vadd.f32 %v351, %v420
        %v428 = vadd.f32 %v370, %v424
        %v429 = vmul.f32 %v291, 1.442695
        %v430 = vpow.pop %v429
        %v431 = vmul.f32 %v293, 1.442695
        %v432 = vpow.pop %v431
        %434 = vset.pattern.permute.xlu0 0
        %435 = vperm.xlu0 %434, %v284
        %v436 = vpop.permute.xlu0 %435
        %v438 = vmul.f32 %v430, %v436
        %v439 = vmul.f32 %v432, %v436
        %v440 = vmul.f32 %v296, 1.442695
        %v441 = vpow.pop %v440
        %v442 = vmul.f32 %v297, 1.442695
        %v443 = vpow.pop %v442
        %444 = vset.pattern.permute.xlu0 1
        %445 = vperm.xlu0 %444, %v284
        %v446 = vpop.permute.xlu0 %445
        %v448 = vmul.f32 %v432, %v446
        %v449 = vmul.f32 %v441, %v446
        %v450 = vmul.f32 %v443, %v446
        %v451 = vsub.f32 %v414, %v302
        %v452 = vsub.f32 %v415, %v303
        %v453 = vmul.f32 %v451, %v451
        %v454 = vmul.f32 %v452, %v452
        %v455 = vsub.f32 %v427, %v303
        %v456 = vsub.f32 %v428, %v305
        %v457 = vmul.f32 %v455, %v455
        %v458 = vmul.f32 %v456, %v456
        %461 = vrot.lane.b32.xlu0 %v457, 87
        %v462 = vpop.permute.xlu0 %461
        %463 = vrot.lane.b32.xlu0 %v458, 87
        %v464 = vpop.permute.xlu0 %463
        %vm465 = vcmask 711680
        %v466 = vsel %vm465, %v462, %v464
        %v469 = vadd.f32 %v453, %v466
        %v470 = vadd.f32 %v454, %v464
        %v471 = vsub.f32 %v438, %v305
        %v472 = vsub.f32 %v439, %v307
        %v473 = vmul.f32 %v471, %v471
        %v474 = vmul.f32 %v472, %v472
        %v475 = vsub.f32 %v448, %v307
        %v476 = vsub.f32 %v449, %v310
        %v477 = vsub.f32 %v450, %v311
        %v478 = vmul.f32 %v475, %v475
        %v479 = vmul.f32 %v476, %v476
        %v480 = vmul.f32 %v477, %v477
        %484 = vrot.lane.b32.xlu0 %v478, 87
        %v485 = vpop.permute.xlu0 %484
        %486 = vrot.lane.b32.xlu0 %v479, 87
        %v487 = vpop.permute.xlu0 %486
        %488 = vrot.lane.b32.xlu0 %v480, 87
        %v489 = vpop.permute.xlu0 %488
        %v490 = vsel %vm465, %v485, %v487
        %v491 = vsel %vm465, %v487, %v489
        %v494 = vadd.f32 %v473, %v490
        %v495 = vadd.f32 %v474, %v491
        %v496 = vlog2.pop %v393
        %v497 = vmul.f32 %v496, 0.6931472
        %v498 = vlog2.pop %v408
        %v499 = vmul.f32 %v498, 0.6931472
        %v500 = vmax.f32 %v497, -100.0
        %v501 = vmax.f32 %v499, -100.0
        %v502 = vsub.f32 1.0, %v393
        %v503 = vsub.f32 1.0, %v408
        %v504 = vlog2.pop %v502
        %v505 = vmul.f32 %v504, 0.6931472
        %v506 = vlog2.pop %v503
        %v507 = vmul.f32 %v506, 0.6931472
        %v508 = vmax.f32 %v505, -100.0
        %v509 = vmax.f32 %v507, -100.0
        %v510 = vmul.f32 %v311, %v500
        %v511 = vmul.f32 %v313, %v501
        %v512 = vsub.f32 1.0, %v311
        %v513 = vsub.f32 1.0, %v313
        %v514 = vmul.f32 %v512, %v508
        %v515 = vmul.f32 %v513, %v509
        %v516 = vadd.f32 %v510, %v514
        %v517 = vadd.f32 %v511, %v515
        %v518 = vsub.f32 0.0, %v516
        %v519 = vsub.f32 0.0, %v517
        %v520 = vld [vmem:[%s224 + $0x30] sm:$0xff]
        %v521 = vld [vmem:[%s224 + $0x38] sm:$0xff]
        %v522 = vsel %vm287, %v520, 0.0
        %v523 = vsel %vm287, %v521, 0.0
        %v524 = vld [vmem:[%s234 + $0x30] sm:$0xff]
        %v525 = vld [vmem:[%s234 + $0x38] sm:$0xff]
        %v526 = vsel %vm287, %v524, 0.0
        %v527 = vsel %vm287, %v525, 0.0
        %v528 = vld [vmem:[%s224 + $0x40] sm:$0xff]
        %v529 = vld [vmem:[%s224 + $0x48] sm:$0xff]
        %v530 = vsel %vm287, %v528, 0.0
        %v531 = vsel %vm287, %v529, 0.0
        %v532 = vld [vmem:[%s234 + $0x40] sm:$0xff]
        %v533 = vld [vmem:[%s234 + $0x48] sm:$0xff]
        %v534 = vsel %vm287, %v532, 0.0
        %v535 = vsel %vm287, %v533, 0.0
        %539 = vrot.lane.b32.xlu0 %v523, 87
        %v540 = vpop.permute.xlu0 %539
        %541 = vrot.lane.b32.xlu0 %v530, 87
        %v542 = vpop.permute.xlu0 %541
        %543 = vrot.lane.b32.xlu0 %v531, 87
        %v544 = vpop.permute.xlu0 %543
        %v545 = vsel %vm465, %v540, %v542
        %v546 = vsel %vm465, %v542, %v544
        %v549 = vmax.f32 %v522, %v545
        %v550 = vmax.f32 %v523, %v546
        %553 = vrot.lane.b32.xlu0 %v526, 41
        %v554 = vpop.permute.xlu0 %553
        %555 = vrot.lane.b32.xlu0 %v527, 41
        %v556 = vpop.permute.xlu0 %555
        %v557 = vsel %vm423, %v554, %v556
        %vm561 = vcmp.gt.f32.partialorder %v527, %v554
        %vm562 = vcmp.gt.f32.partialorder %v534, %v557
        %vm563 = vcmp.gt.f32.partialorder %v535, %v556
        %v564 = vsel %vm561, %v527, %v554
        %v565 = vsel %vm562, %v534, %v557
        %v566 = vsel %vm563, %v535, %v556
        %v567 = vsel %vm561, 1.0, 0.0
        %v568 = vsel %vm562, 1.0, 0.0
        %v569 = vsel %vm563, 1.0, 0.0
        %v570 = vld [vmem:[%s224 + $0x50] sm:$0xff]
        %v571 = vsel %vm287, %v570, 0.0
        %v572 = vld [vmem:[%s234 + $0x50] sm:$0xff]
        %v573 = vsel %vm287, %v572, 0.0
        %575 = vrot.lane.b32.xlu0 %v531, 46
        %v576 = vpop.permute.xlu0 %575
        %577 = vrot.lane.b32.xlu0 %v571, 46
        %v578 = vpop.permute.xlu0 %577
        %vm579 = vcmask 375808
        %v580 = vsel %vm579, %v576, %v578
        %v583 = vmax.f32 %v549, %v576
        %v584 = vmax.f32 %v550, %v580
        %588 = vrot.lane.b32.xlu0 %v564, 41
        %v589 = vpop.permute.xlu0 %588
        %590 = vrot.lane.b32.xlu0 %v565, 41
        %v591 = vpop.permute.xlu0 %590
        %592 = vrot.lane.b32.xlu0 %v566, 41
        %v593 = vpop.permute.xlu0 %592
        %v594 = vsel %vm423, %v589, %v591
        %v595 = vsel %vm423, %v591, %v593
        %vm598 = vcmp.gt.f32.partialorder %v535, %v594
        %vm599 = vcmp.gt.f32.partialorder %v573, %v595
        %v600 = vsel %vm598, %v535, %v594
        %v601 = vsel %vm599, %v573, %v595
        %605 = vrot.lane.b32.xlu0 %v567, 41
        %v606 = vpop.permute.xlu0 %605
        %607 = vrot.lane.b32.xlu0 %v568, 41
        %v608 = vpop.permute.xlu0 %607
        %609 = vrot.lane.b32.xlu0 %v569, 41
        %v610 = vpop.permute.xlu0 %609
        %v611 = vsel %vm423, %v606, %v608
        %v612 = vsel %vm423, %v608, %v610
        %v615 = vsel %vm598, 2.0, %v611
        %v616 = vsel %vm599, 2.0, %v612
        %v617 = vld [vmem:[%s224 + $0x58] sm:$0xff]
        %v618 = vsel %vm287, %v617, 0.0
        %v619 = vld [vmem:[%s234 + $0x58] sm:$0xff]
        %v620 = vsel %vm287, %v619, 0.0
        %622 = vrot.lane.b32.xlu0 %v571, 5
        %v623 = vpop.permute.xlu0 %622
        %624 = vrot.lane.b32.xlu0 %v618, 5
        %v625 = vpop.permute.xlu0 %624
        %vm626 = vcmask 39936
        %v627 = vsel %vm626, %v623, %v625
        %v630 = vmax.f32 %v583, %v623
        %v631 = vmax.f32 %v584, %v627
        %634 = vrot.lane.b32.xlu0 %v600, 41
        %v635 = vpop.permute.xlu0 %634
        %636 = vrot.lane.b32.xlu0 %v601, 41
        %v637 = vpop.permute.xlu0 %636
        %v638 = vsel %vm423, %v635, %v637
        %vm641 = vcmp.gt.f32.partialorder %v573, %v635
        %vm642 = vcmp.gt.f32.partialorder %v620, %v638
        %v643 = vsel %vm641, %v573, %v635
        %v644 = vsel %vm642, %v620, %v638
        %647 = vrot.lane.b32.xlu0 %v615, 41
        %v648 = vpop.permute.xlu0 %647
        %649 = vrot.lane.b32.xlu0 %v616, 41
        %v650 = vpop.permute.xlu0 %649
        %v651 = vsel %vm423, %v648, %v650
        %v654 = vsel %vm641, 3.0, %v648
        %v655 = vsel %vm642, 3.0, %v651
        %v656 = vld [vmem:[%s224 + $0x60] sm:$0xff]
        %v657 = vld [vmem:[%s224 + $0x68] sm:$0xff]
        %v658 = vsel %vm287, %v656, 0.0
        %v659 = vsel %vm287, %v657, 0.0
        %v660 = vld [vmem:[%s234 + $0x60] sm:$0xff]
        %v661 = vld [vmem:[%s234 + $0x68] sm:$0xff]
        %v662 = vsel %vm287, %v660, 0.0
        %v663 = vsel %vm287, %v661, 0.0
        %666 = vrot.lane.b32.xlu0 %v618, 92
        %v667 = vpop.permute.xlu0 %666
        %668 = vrot.lane.b32.xlu0 %v658, 92
        %v669 = vpop.permute.xlu0 %668
        %670 = vrot.lane.b32.xlu0 %v659, 92
        %v671 = vpop.permute.xlu0 %670
        %vm672 = vcmask 752640
        %v673 = vsel %vm672, %v667, %v669
        %v674 = vsel %vm672, %v669, %v671
        %v677 = vmax.f32 %v630, %v673
        %v678 = vmax.f32 %v631, %v674
        %681 = vrot.lane.b32.xlu0 %v643, 41
        %v682 = vpop.permute.xlu0 %681
        %683 = vrot.lane.b32.xlu0 %v644, 41
        %v684 = vpop.permute.xlu0 %683
        %v685 = vsel %vm423, %v682, %v684
        %vm689 = vcmp.gt.f32.partialorder %v620, %v682
        %vm690 = vcmp.gt.f32.partialorder %v662, %v685
        %vm691 = vcmp.gt.f32.partialorder %v663, %v684
        %v692 = vsel %vm689, %v620, %v682
        %v693 = vsel %vm690, %v662, %v685
        %v694 = vsel %vm691, %v663, %v684
        %697 = vrot.lane.b32.xlu0 %v654, 41
        %v698 = vpop.permute.xlu0 %697
        %699 = vrot.lane.b32.xlu0 %v655, 41
        %v700 = vpop.permute.xlu0 %699
        %v701 = vsel %vm423, %v698, %v700
        %v705 = vsel %vm689, 4.0, %v698
        %v706 = vsel %vm690, 4.0, %v701
        %v707 = vsel %vm691, 4.0, %v700
        %v708 = vld [vmem:[%s224 + $0x70] sm:$0xff]
        %v709 = vsel %vm287, %v708, 0.0
        %v710 = vld [vmem:[%s234 + $0x70] sm:$0xff]
        %v711 = vsel %vm287, %v710, 0.0
        %713 = vrot.lane.b32.xlu0 %v659, 51
        %v714 = vpop.permute.xlu0 %713
        %715 = vrot.lane.b32.xlu0 %v709, 51
        %v716 = vpop.permute.xlu0 %715
        %vm717 = vcmask 416768
        %v718 = vsel %vm717, %v714, %v716
        %v721 = vmax.f32 %v677, %v714
        %v722 = vmax.f32 %v678, %v718
        %726 = vrot.lane.b32.xlu0 %v692, 41
        %v727 = vpop.permute.xlu0 %726
        %728 = vrot.lane.b32.xlu0 %v693, 41
        %v729 = vpop.permute.xlu0 %728
        %730 = vrot.lane.b32.xlu0 %v694, 41
        %v731 = vpop.permute.xlu0 %730
        %v732 = vsel %vm423, %v727, %v729
        %v733 = vsel %vm423, %v729, %v731
        %vm736 = vcmp.gt.f32.partialorder %v663, %v732
        %vm737 = vcmp.gt.f32.partialorder %v711, %v733
        %741 = vrot.lane.b32.xlu0 %v705, 41
        %v742 = vpop.permute.xlu0 %741
        %743 = vrot.lane.b32.xlu0 %v706, 41
        %v744 = vpop.permute.xlu0 %743
        %745 = vrot.lane.b32.xlu0 %v707, 41
        %v746 = vpop.permute.xlu0 %745
        %v747 = vsel %vm423, %v742, %v744
        %v748 = vsel %vm423, %v744, %v746
        %v751 = vsel %vm736, 5.0, %v747
        %v752 = vsel %vm737, 5.0, %v748
        %v753 = vsub.f32 %v522, %v721
        %v754 = vsub.f32 %v523, %v722
        %v755 = vmul.f32 %v753, 1.442695
        %v756 = vpow.pop %v755
        %v757 = vmul.f32 %v754, 1.442695
        %v758 = vpow.pop %v757
        %761 = vrot.lane.b32.xlu0 %v721, 41
        %v762 = vpop.permute.xlu0 %761
        %763 = vrot.lane.b32.xlu0 %v722, 41
        %v764 = vpop.permute.xlu0 %763
        %v765 = vsel %vm423, %v762, %v764
        %v769 = vsub.f32 %v523, %v762
        %v770 = vsub.f32 %v530, %v765
        %v771 = vsub.f32 %v531, %v764
        %v772 = vmul.f32 %v769, 1.442695
        %v773 = vpow.pop %v772
        %v774 = vmul.f32 %v770, 1.442695
        %v775 = vpow.pop %v774
        %v776 = vmul.f32 %v771, 1.442695
        %v777 = vpow.pop %v776
        %781 = vrot.lane.b32.xlu0 %v773, 87
        %v782 = vpop.permute.xlu0 %781
        %783 = vrot.lane.b32.xlu0 %v775, 87
        %v784 = vpop.permute.xlu0 %783
        %785 = vrot.lane.b32.xlu0 %v777, 87
        %v786 = vpop.permute.xlu0 %785
        %v787 = vsel %vm465, %v782, %v784
        %v788 = vsel %vm465, %v784, %v786
        %v791 = vadd.f32 %v756, %v787
        %v792 = vadd.f32 %v758, %v788
        %793 = vrot.lane.b32.xlu0 %v721, 82
        %v794 = vpop.permute.xlu0 %793
        %795 = vrot.lane.b32.xlu0 %v722, 82
        %v796 = vpop.permute.xlu0 %795
        %vm797 = vcmask 670720
        %v798 = vsel %vm797, %v794, %v796
        %v801 = vsub.f32 %v531, %v798
        %v802 = vsub.f32 %v571, %v796
        %v803 = vmul.f32 %v801, 1.442695
        %v804 = vpow.pop %v803
        %v805 = vmul.f32 %v802, 1.442695
        %v806 = vpow.pop %v805
        %809 = vrot.lane.b32.xlu0 %v804, 46
        %v810 = vpop.permute.xlu0 %809
        %811 = vrot.lane.b32.xlu0 %v806, 46
        %v812 = vpop.permute.xlu0 %811
        %v813 = vsel %vm579, %v810, %v812
        %v816 = vadd.f32 %v791, %v810
        %v817 = vadd.f32 %v792, %v813
        %818 = vrot.lane.b32.xlu0 %v721, 123
        %v819 = vpop.permute.xlu0 %818
        %820 = vrot.lane.b32.xlu0 %v722, 123
        %v821 = vpop.permute.xlu0 %820
        %vm822 = vcmask 1006592
        %v823 = vsel %vm822, %v819, %v821
        %v826 = vsub.f32 %v571, %v823
        %v827 = vsub.f32 %v618, %v821
        %v828 = vmul.f32 %v826, 1.442695
        %v829 = vpow.pop %v828
        %v830 = vmul.f32 %v827, 1.442695
        %v831 = vpow.pop %v830
        %834 = vrot.lane.b32.xlu0 %v829, 5
        %v835 = vpop.permute.xlu0 %834
        %836 = vrot.lane.b32.xlu0 %v831, 5
        %v837 = vpop.permute.xlu0 %836
        %v838 = vsel %vm626, %v835, %v837
        %v841 = vadd.f32 %v816, %v835
        %v842 = vadd.f32 %v817, %v838
        %843 = vrot.lane.b32.xlu0 %v721, 36
        %v844 = vpop.permute.xlu0 %843
        %845 = vrot.lane.b32.xlu0 %v722, 36
        %v846 = vpop.permute.xlu0 %845
        %vm847 = vcmask 293888
        %v848 = vsel %vm847, %v844, %v846
        %v852 = vsub.f32 %v618, %v844
        %v853 = vsub.f32 %v658, %v848
        %v854 = vsub.f32 %v659, %v846
        %v855 = vmul.f32 %v852, 1.442695
        %v856 = vpow.pop %v855
        %v857 = vmul.f32 %v853, 1.442695
        %v858 = vpow.pop %v857
        %v859 = vmul.f32 %v854, 1.442695
        %v860 = vpow.pop %v859
        %864 = vrot.lane.b32.xlu0 %v856, 92
        %v865 = vpop.permute.xlu0 %864
        %866 = vrot.lane.b32.xlu0 %v858, 92
        %v867 = vpop.permute.xlu0 %866
        %868 = vrot.lane.b32.xlu0 %v860, 92
        %v869 = vpop.permute.xlu0 %868
        %v870 = vsel %vm672, %v865, %v867
        %v871 = vsel %vm672, %v867, %v869
        %v874 = vadd.f32 %v841, %v870
        %v875 = vadd.f32 %v842, %v871
        %876 = vrot.lane.b32.xlu0 %v721, 77
        %v877 = vpop.permute.xlu0 %876
        %878 = vrot.lane.b32.xlu0 %v722, 77
        %v879 = vpop.permute.xlu0 %878
        %vm880 = vcmask 629760
        %v881 = vsel %vm880, %v877, %v879
        %v884 = vsub.f32 %v659, %v881
        %v885 = vsub.f32 %v709, %v879
        %v886 = vmul.f32 %v884, 1.442695
        %v887 = vpow.pop %v886
        %v888 = vmul.f32 %v885, 1.442695
        %v889 = vpow.pop %v888
        %892 = vrot.lane.b32.xlu0 %v887, 51
        %v893 = vpop.permute.xlu0 %892
        %894 = vrot.lane.b32.xlu0 %v889, 51
        %v895 = vpop.permute.xlu0 %894
        %v896 = vsel %vm717, %v893, %v895
        %v899 = vadd.f32 %v874, %v893
        %v900 = vadd.f32 %v875, %v896
        %v901 = vrcp.pop %v899
        %v902 = vmul.f32 %v899, %v901
        %v903 = vsub.f32 1.0, %v902
        %v904 = vmul.f32 %v901, %v903
        %v905 = vadd.f32 %v901, %v904
        %vm906 = vweird.f32 %v899
        %vm907 = vweird.f32 %v901
        %vm908 = vmor %vm906, %vm907
        %v909 = vsel %vm908, %v901, %v905
        %v910 = vand.u32 2147483647, %v899
        %vm911 = vcmp.eq.f32.partialorder %v910, 8.507059e+37
        %v912 = vand.u32 %v899, 2147483648
        %v913 = vor.u32 1.1754944e-38, %v912
        %v914 = vsel %vm911, %v913, %v909
        %v915 = vmul.f32 1.0, %v914
        %v916 = vrcp.pop %v900
        %v917 = vmul.f32 %v900, %v916
        %v918 = vsub.f32 1.0, %v917
        %v919 = vmul.f32 %v916, %v918
        %v920 = vadd.f32 %v916, %v919
        %vm921 = vweird.f32 %v900
        %vm922 = vweird.f32 %v916
        %vm923 = vmor %vm921, %vm922
        %v924 = vsel %vm923, %v916, %v920
        %v925 = vand.u32 2147483647, %v900
        %vm926 = vcmp.eq.f32.partialorder %v925, 8.507059e+37
        %v927 = vand.u32 %v900, 2147483648
        %v928 = vor.u32 1.1754944e-38, %v927
        %v929 = vsel %vm926, %v928, %v924
        %v930 = vmul.f32 1.0, %v929
        %v931 = vmul.f32 %v756, %v915
        %v932 = vmul.f32 %v758, %v930
        %v933 = vmul.f32 %v931, 1.442695
        %v934 = vpow.pop %v933
        %v935 = vmul.f32 %v932, 1.442695
        %v936 = vpow.pop %v935
        %v937 = vadd.f32 %v934, 0.0
        %v938 = vadd.f32 %v936, 0.0
        %vm939 = vcmp.eq.f32.partialorder %v751, 0.0
        %vm940 = vcmp.eq.f32.partialorder %v752, 0.0
        %943 = vrot.lane.b32.xlu0 %v931, 77
        %v944 = vpop.permute.xlu0 %943
        %945 = vrot.lane.b32.xlu0 %v932, 77
        %v946 = vpop.permute.xlu0 %945
        %v947 = vsel %vm880, %v944, %v946
        %v950 = vsel %vm939, %v947, 0.0
        %v951 = vsel %vm940, %v946, 0.0
        %v952 = vadd.f32 %v950, 0.0
        %v953 = vadd.f32 %v951, 0.0
        %956 = vrot.lane.b32.xlu0 %v915, 41
        %v957 = vpop.permute.xlu0 %956
        %958 = vrot.lane.b32.xlu0 %v930, 41
        %v959 = vpop.permute.xlu0 %958
        %v960 = vsel %vm423, %v957, %v959
        %v964 = vmul.f32 %v773, %v957
        %v965 = vmul.f32 %v775, %v960
        %v966 = vmul.f32 %v777, %v959
        %v967 = vmul.f32 %v964, 1.442695
        %v968 = vpow.pop %v967
        %v969 = vmul.f32 %v965, 1.442695
        %v970 = vpow.pop %v969
        %v971 = vmul.f32 %v966, 1.442695
        %v972 = vpow.pop %v971
        %976 = vrot.lane.b32.xlu0 %v968, 87
        %v977 = vpop.permute.xlu0 %976
        %978 = vrot.lane.b32.xlu0 %v970, 87
        %v979 = vpop.permute.xlu0 %978
        %980 = vrot.lane.b32.xlu0 %v972, 87
        %v981 = vpop.permute.xlu0 %980
        %v982 = vsel %vm465, %v977, %v979
        %v983 = vsel %vm465, %v979, %v981
        %v986 = vadd.f32 %v937, %v982
        %v987 = vadd.f32 %v938, %v983
        %vm988 = vcmp.eq.f32.partialorder %v751, 1.0
        %vm989 = vcmp.eq.f32.partialorder %v752, 1.0
        %993 = vrot.lane.b32.xlu0 %v964, 36
        %v994 = vpop.permute.xlu0 %993
        %995 = vrot.lane.b32.xlu0 %v965, 36
        %v996 = vpop.permute.xlu0 %995
        %997 = vrot.lane.b32.xlu0 %v966, 36
        %v998 = vpop.permute.xlu0 %997
        %v999 = vsel %vm847, %v994, %v996
        %v1000 = vsel %vm847, %v996, %v998
        %v1003 = vsel %vm988, %v999, 0.0
        %v1004 = vsel %vm989, %v1000, 0.0
        %v1005 = vadd.f32 %v952, %v1003
        %v1006 = vadd.f32 %v953, %v1004
        %1007 = vrot.lane.b32.xlu0 %v915, 82
        %v1008 = vpop.permute.xlu0 %1007
        %1009 = vrot.lane.b32.xlu0 %v930, 82
        %v1010 = vpop.permute.xlu0 %1009
        %v1011 = vsel %vm797, %v1008, %v1010
        %v1014 = vmul.f32 %v804, %v1011
        %v1015 = vmul.f32 %v806, %v1010
        %v1016 = vmul.f32 %v1014, 1.442695
        %v1017 = vpow.pop %v1016
        %v1018 = vmul.f32 %v1015, 1.442695
        %v1019 = vpow.pop %v1018
        %1022 = vrot.lane.b32.xlu0 %v1017, 46
        %v1023 = vpop.permute.xlu0 %1022
        %1024 = vrot.lane.b32.xlu0 %v1019, 46
        %v1025 = vpop.permute.xlu0 %1024
        %v1026 = vsel %vm579, %v1023, %v1025
        %v1029 = vadd.f32 %v986, %v1023
        %v1030 = vadd.f32 %v987, %v1026
        %vm1031 = vcmp.eq.f32.partialorder %v751, 2.0
        %vm1032 = vcmp.eq.f32.partialorder %v752, 2.0
        %1035 = vrot.lane.b32.xlu0 %v1014, 123
        %v1036 = vpop.permute.xlu0 %1035
        %1037 = vrot.lane.b32.xlu0 %v1015, 123
        %v1038 = vpop.permute.xlu0 %1037
        %v1039 = vsel %vm822, %v1036, %v1038
        %v1042 = vsel %vm1031, %v1039, 0.0
        %v1043 = vsel %vm1032, %v1038, 0.0
        %v1044 = vadd.f32 %v1005, %v1042
        %v1045 = vadd.f32 %v1006, %v1043
        %1046 = vrot.lane.b32.xlu0 %v915, 123
        %v1047 = vpop.permute.xlu0 %1046
        %1048 = vrot.lane.b32.xlu0 %v930, 123
        %v1049 = vpop.permute.xlu0 %1048
        %v1050 = vsel %vm822, %v1047, %v1049
        %v1053 = vmul.f32 %v829, %v1050
        %v1054 = vmul.f32 %v831, %v1049
        %v1055 = vmul.f32 %v1053, 1.442695
        %v1056 = vpow.pop %v1055
        %v1057 = vmul.f32 %v1054, 1.442695
        %v1058 = vpow.pop %v1057
        %1061 = vrot.lane.b32.xlu0 %v1056, 5
        %v1062 = vpop.permute.xlu0 %1061
        %1063 = vrot.lane.b32.xlu0 %v1058, 5
        %v1064 = vpop.permute.xlu0 %1063
        %v1065 = vsel %vm626, %v1062, %v1064
        %v1068 = vadd.f32 %v1029, %v1062
        %v1069 = vadd.f32 %v1030, %v1065
        %vm1070 = vcmp.eq.f32.partialorder %v751, 3.0
        %vm1071 = vcmp.eq.f32.partialorder %v752, 3.0
        %1074 = vrot.lane.b32.xlu0 %v1053, 82
        %v1075 = vpop.permute.xlu0 %1074
        %1076 = vrot.lane.b32.xlu0 %v1054, 82
        %v1077 = vpop.permute.xlu0 %1076
        %v1078 = vsel %vm797, %v1075, %v1077
        %v1081 = vsel %vm1070, %v1078, 0.0
        %v1082 = vsel %vm1071, %v1077, 0.0
        %v1083 = vadd.f32 %v1044, %v1081
        %v1084 = vadd.f32 %v1045, %v1082
        %1085 = vrot.lane.b32.xlu0 %v915, 36
        %v1086 = vpop.permute.xlu0 %1085
        %1087 = vrot.lane.b32.xlu0 %v930, 36
        %v1088 = vpop.permute.xlu0 %1087
        %v1089 = vsel %vm847, %v1086, %v1088
        %v1093 = vmul.f32 %v856, %v1086
        %v1094 = vmul.f32 %v858, %v1089
        %v1095 = vmul.f32 %v860, %v1088
        %v1096 = vmul.f32 %v1093, 1.442695
        %v1097 = vpow.pop %v1096
        %v1098 = vmul.f32 %v1094, 1.442695
        %v1099 = vpow.pop %v1098
        %v1100 = vmul.f32 %v1095, 1.442695
        %v1101 = vpow.pop %v1100
        %1105 = vrot.lane.b32.xlu0 %v1097, 92
        %v1106 = vpop.permute.xlu0 %1105
        %1107 = vrot.lane.b32.xlu0 %v1099, 92
        %v1108 = vpop.permute.xlu0 %1107
        %1109 = vrot.lane.b32.xlu0 %v1101, 92
        %v1110 = vpop.permute.xlu0 %1109
        %v1111 = vsel %vm672, %v1106, %v1108
        %v1112 = vsel %vm672, %v1108, %v1110
        %v1115 = vadd.f32 %v1068, %v1111
        %v1116 = vadd.f32 %v1069, %v1112
        %vm1117 = vcmp.eq.f32.partialorder %v751, 4.0
        %vm1118 = vcmp.eq.f32.partialorder %v752, 4.0
        %1122 = vrot.lane.b32.xlu0 %v1093, 41
        %v1123 = vpop.permute.xlu0 %1122
        %1124 = vrot.lane.b32.xlu0 %v1094, 41
        %v1125 = vpop.permute.xlu0 %1124
        %1126 = vrot.lane.b32.xlu0 %v1095, 41
        %v1127 = vpop.permute.xlu0 %1126
        %v1128 = vsel %vm423, %v1123, %v1125
        %v1129 = vsel %vm423, %v1125, %v1127
        %v1132 = vsel %vm1117, %v1128, 0.0
        %v1133 = vsel %vm1118, %v1129, 0.0
        %v1134 = vadd.f32 %v1083, %v1132
        %v1135 = vadd.f32 %v1084, %v1133
        %1136 = vrot.lane.b32.xlu0 %v915, 77
        %v1137 = vpop.permute.xlu0 %1136
        %1138 = vrot.lane.b32.xlu0 %v930, 77
        %v1139 = vpop.permute.xlu0 %1138
        %v1140 = vsel %vm880, %v1137, %v1139
        %v1143 = vmul.f32 %v887, %v1140
        %v1144 = vmul.f32 %v889, %v1139
        %v1145 = vmul.f32 %v1143, 1.442695
        %v1146 = vpow.pop %v1145
        %v1147 = vmul.f32 %v1144, 1.442695
        %v1148 = vpow.pop %v1147
        %1151 = vrot.lane.b32.xlu0 %v1146, 51
        %v1152 = vpop.permute.xlu0 %1151
        %1153 = vrot.lane.b32.xlu0 %v1148, 51
        %v1154 = vpop.permute.xlu0 %1153
        %v1155 = vsel %vm717, %v1152, %v1154
        %v1158 = vadd.f32 %v1115, %v1152
        %v1159 = vadd.f32 %v1116, %v1155
        %vm1160 = vcmp.eq.f32.partialorder %v751, 5.0
        %vm1161 = vcmp.eq.f32.partialorder %v752, 5.0
        %v1162 = vsel %vm1160, %v1143, 0.0
        %v1163 = vsel %vm1161, %v1144, 0.0
        %v1164 = vadd.f32 %v1134, %v1162
        %v1165 = vadd.f32 %v1135, %v1163
        %v1166 = vlog2.pop %v1158
        %v1167 = vmul.f32 %v1166, 0.6931472
        %v1168 = vlog2.pop %v1159
        %v1169 = vmul.f32 %v1168, 0.6931472
        %1172 = vrot.lane.b32.xlu0 %v1164, 51
        %v1173 = vpop.permute.xlu0 %1172
        %1174 = vrot.lane.b32.xlu0 %v1165, 51
        %v1175 = vpop.permute.xlu0 %1174
        %v1176 = vsel %vm717, %v1173, %v1175
        %v1179 = vsub.f32 %v1167, %v1173
        %v1180 = vsub.f32 %v1169, %v1176
        %v1181 = vmul.f32 %v469, %v279
        %v1182 = vmul.f32 %v470, %v279
        %v1183 = vmul.f32 %v494, %v279
        %v1184 = vmul.f32 %v495, %v279
        %v1185 = vmul.f32 %v518, %v279
        %v1186 = vmul.f32 %v519, %v279
        %v1187 = vmul.f32 %v1179, %v279
        %v1188 = vmul.f32 %v1180, %v279
        %v1189 = vsel %vm423, %v1182, 0.0
        %v1190 = vadd.f32 %v1181, %v1189
        %1191 = vadd.xlane.f32.xlu0 %v1190
        %v1192 = vpop.xlane.xlu0 %1191
        %v1193 = vrot.slane %v1192, 4
        %v1194 = vadd.f32 %v1192, %v1193
        %v1195 = vrot.slane %v1194, 2
        %v1196 = vadd.f32 %v1194, %v1195
        %v1197 = vrot.slane %v1196, 1
        %v1198 = vadd.f32 %v1196, %v1197
        %s1199 = vtos %v1198
        %v1200 = vstv %s1199
        %vm1201 = vcmask 0
        %1202 = vst.msk [vmem:[%s267] sm:$0x1] %vm1201, %v1200
        %1205 = vrot.lane.b32.xlu0 %v1183, 46
        %v1206 = vpop.permute.xlu0 %1205
        %1207 = vrot.lane.b32.xlu0 %v1184, 46
        %v1208 = vpop.permute.xlu0 %1207
        %v1209 = vsel %vm579, %v1206, %v1208
        %v1212 = vsel %vm423, %v1208, 0.0
        %v1213 = vadd.f32 %v1209, %v1212
        %1214 = vadd.xlane.f32.xlu0 %v1213
        %v1215 = vpop.xlane.xlu0 %1214
        %v1216 = vrot.slane %v1215, 4
        %v1217 = vadd.f32 %v1215, %v1216
        %v1218 = vrot.slane %v1217, 2
        %v1219 = vadd.f32 %v1217, %v1218
        %v1220 = vrot.slane %v1219, 1
        %v1221 = vadd.f32 %v1219, %v1220
        %s1222 = vtos %v1221
        %v1223 = vstv %s1222
        %vm1224 = vcmask 8200
        %1225 = vst.msk [vmem:[%s267] sm:$0x1] %vm1224, %v1223
        %1228 = vrot.lane.b32.xlu0 %v1185, 92
        %v1229 = vpop.permute.xlu0 %1228
        %1230 = vrot.lane.b32.xlu0 %v1186, 92
        %v1231 = vpop.permute.xlu0 %1230
        %v1232 = vsel %vm672, %v1229, %v1231
        %v1235 = vsel %vm423, %v1231, 0.0
        %v1236 = vadd.f32 %v1232, %v1235
        %1237 = vadd.xlane.f32.xlu0 %v1236
        %v1238 = vpop.xlane.xlu0 %1237
        %v1239 = vrot.slane %v1238, 4
        %v1240 = vadd.f32 %v1238, %v1239
        %v1241 = vrot.slane %v1240, 2
        %v1242 = vadd.f32 %v1240, %v1241
        %v1243 = vrot.slane %v1242, 1
        %v1244 = vadd.f32 %v1242, %v1243
        %s1245 = vtos %v1244
        %v1246 = vstv %s1245
        %vm1247 = vcmask 16400
        %1248 = vst.msk [vmem:[%s267] sm:$0x1] %vm1247, %v1246
        %1251 = vrot.lane.b32.xlu0 %v1187, 51
        %v1252 = vpop.permute.xlu0 %1251
        %1253 = vrot.lane.b32.xlu0 %v1188, 51
        %v1254 = vpop.permute.xlu0 %1253
        %v1255 = vsel %vm717, %v1252, %v1254
        %v1258 = vsel %vm423, %v1254, 0.0
        %v1259 = vadd.f32 %v1255, %v1258
        %1260 = vadd.xlane.f32.xlu0 %v1259
        %v1261 = vpop.xlane.xlu0 %1260
        %v1262 = vrot.slane %v1261, 4
        %v1263 = vadd.f32 %v1261, %v1262
        %v1264 = vrot.slane %v1263, 2
        %v1265 = vadd.f32 %v1263, %v1264
        %v1266 = vrot.slane %v1265, 1
        %v1267 = vadd.f32 %v1265, %v1266
        %s1268 = vtos %v1267
        %v1269 = vstv %s1268
        %vm1270 = vcmask 24600
        %1271 = vst.msk [vmem:[%s267] sm:$0x1] %vm1270, %v1269
        %s1272 = sand.u32 %s131, 1
        %s1273 = scalar_lea.sflag [#allocation4], %s1272
        %s1274 = sand.u32 %s131, 1
        %s1275 = scalar_lea.vmem [#allocation7], %s1274
        // Predicated region
        $region45: #{tpu_custom_call.1} parent=35 // pred_check
          %p1276 = pneg %p141
        $region46: #{tpu_custom_call.1} parent=35 // pred_check_branch
          %1278 = sbr.rel (%p1276) target = $region48
        $region47: #{tpu_custom_call.1} parent=35 // pred_region
          %1280 = vsyncadd %s1273, 0
          %s1281 = scalar_lea.hbm %s4, %s24
          %s1283 = sshll.u32 %s1275, 4
          %s1284 = int_to_ptr.vmem [resolvable:$true] %s1283
          %s1285 = sshll.u32 %s1281, 4
          %s1286 = int_to_ptr.hbm [resolvable:$true] %s1285
          %1288 = dma.vmem_to_hbm [thread:$0]  %s1284, 16, %s1286, %s1273
        $region48: #{tpu_custom_call.1} parent=35 // pred_fallthru
          _
      $region36: #{tpu_custom_call.1} parent=5 // pred_fallthru
        _
      %p1289 = scmp.le.s32.totalorder 2, %s19
      // Predicated region
      $region49: #{tpu_custom_call.1} parent=5 // pred_check
        %p1290 = pneg %p1289
      $region50: #{tpu_custom_call.1} parent=5 // pred_check_branch
        %1292 = sbr.rel (%p1290) target = $region52
      $region51: #{tpu_custom_call.1} parent=5 // pred_region
        %s1293 = ssub.s32 %s19, 2
        // Predicated region
        $region53: #{tpu_custom_call.1} parent=51 // pred_check
          %p1294 = pneg %p147
        $region54: #{tpu_custom_call.1} parent=51 // pred_check_branch
          %1296 = sbr.rel (%p1294) target = $region56
        $region55: #{tpu_custom_call.1} parent=51 // pred_region
          %s1297 = sand.u32 %s132, 1
          %s1298 = scalar_lea.sflag [#allocation4], %s1297
          %s1299 = sand.u32 %s132, 1
          %s1300 = scalar_lea.vmem [#allocation7], %s1299
          %1302 = dma.done %s1298, 16
        $region56: #{tpu_custom_call.1} parent=51 // pred_fallthru
          _
      $region52: #{tpu_custom_call.1} parent=5 // pred_fallthru
        _
    $region6: #{tpu_custom_call.1} parent=1 // loop_footer
      %s23 = sadd.s32 1, %s19
    $region7: #{tpu_custom_call.1} parent=1 // loop_footer_branch
      %18 = sbr.rel target = $region3
    $region8: #{tpu_custom_call.1} parent=1 // loop_exit
      _
    %1303 = vsyncpa [#allocation3], 1
    %s1304 = scalar_lea.sflag [#allocation3], 1
    %1305 = vsyncpa %s1304, 1
    %1306 = vsyncpa [#allocation6], 1
    %s1307 = scalar_lea.sflag [#allocation6], 1
    %1308 = vsyncpa %s1307, 1
    %1309 = vsyncpa [#allocation4], 1
    %s1310 = scalar_lea.sflag [#allocation4], 1
    %1311 = vsyncpa %s1310, 1

</llo_original>
